<compile_context>
chip_gen: v6e
topology: v6e:2x2x1
jax: 0.10.0
libtpu: 0.0.40
codegen_flags: <defaults>
</compile_context>

<pallas_src>
import jax
import jax.numpy as jnp
from jax.experimental import pallas as pl
from jax.experimental.pallas import tpu as pltpu

LANE = 128
SUBLANE = 8


# ----------------------------- small helpers -----------------------------

def _round_up(x, m):
    return ((x + m - 1) // m) * m


def _pad_dim(a, axis, target):
    pad = target - a.shape[axis]
    if pad <= 0:
        return a
    widths = [(0, 0)] * a.ndim
    widths[axis] = (0, pad)
    return jnp.pad(a, widths)


def _bytes(arrays):
    return sum(int(a.size) * a.dtype.itemsize for a in arrays)


def _const_block_spec(arr):
    """Whole-array block with a constant index map: fetched once, stays resident in VMEM."""
    zeros = (0,) * arr.ndim
    return pl.BlockSpec(arr.shape, lambda n, s: zeros)


# ----------------------------- fused kernel -----------------------------

def _make_fused_kernel(n_stages, hooked_nodes, node_dp, K, inv_hw, hw_valid, ts,
                       needs_mask, param_dtype):
    """Fused forward kernel.

    Ref order: x_tile, [w_0, b_0, ..., w_{S-1}, b_{S-1}], [taug_0, const_0, ...]  (inputs)
               [ll_0, ..., ll_{H-1}]                                              (outputs)
               [mean_acc_0, ..., mean_acc_{H-1}]                                  (scratch)
    """
    n_hook = len(hooked_nodes)
    hook_pos = {node: j for j, node in enumerate(hooked_nodes)}

    def kernel(*refs):
        x_ref = refs[0]
        stage_refs = refs[1:1 + 2 * n_stages]
        maha_refs = refs[1 + 2 * n_stages:1 + 2 * n_stages + 2 * n_hook]
        out_refs = refs[1 + 2 * n_stages + 2 * n_hook:1 + 2 * n_stages + 3 * n_hook]
        acc_refs = refs[1 + 2 * n_stages + 3 * n_hook:]

        s = pl.program_id(1)

        @pl.when(s == 0)
        def _init():
            for acc in acc_refs:
                acc[...] = jnp.zeros_like(acc)

        if needs_mask:
            rows = jax.lax.broadcasted_iota(jnp.int32, (ts, 1), 0) + s * ts
            valid = rows < hw_valid

        # Chained 1x1-conv + ReLU stages; the spatial tile never leaves VMEM.
        h = x_ref[0]                                             # (ts, C0_p)
        for st in range(n_stages):
            w_ref = stage_refs[2 * st]
            b_ref = stage_refs[2 * st + 1]
            y = jnp.dot(h.astype(param_dtype), w_ref[...],
                        preferred_element_type=jnp.float32)
            y = jnp.maximum(y + b_ref[...], 0.0)                 # (ts, Cout_p) f32
            if st in hook_pos:
                # fused hook: accumulate output.mean(dim=(2,3)) while the tile is resident
                j = hook_pos[st]
                contrib = jnp.where(valid, y, 0.0) if needs_mask else y
                acc_refs[j][...] += jnp.sum(contrib, axis=0, keepdims=True) * inv_hw
            h = y

        # Fused Mahalanobis score once the per-image channel means are complete.
        @pl.when(s == pl.num_programs(1) - 1)
        def _finalize():
            for j in range(n_hook):
                d_p = node_dp[j]
                taug_ref = maha_refs[2 * j]
                const_ref = maha_refs[2 * j + 1]
                mean = acc_refs[j][...]                                   # (1, d_p) f32
                pf = jnp.dot(mean.astype(param_dtype), taug_ref[...],
                             preferred_element_type=jnp.float32)          # (1, K*d_p + LANE)
                P = pf[:, :K * d_p].reshape(1, K, d_p)                    # m @ T_c
                lin = pf[:, K * d_p:K * d_p + K]                          # m @ (T_c+T_c^T) mu_c
                quad = jnp.sum(P * mean[:, None, :], axis=2)              # m T_c m^T
                out_refs[j][...] = (lin - quad - const_ref[...]).reshape(1, 1, K)

    return kernel


# ----------------------------- Model wrapper -----------------------------

class MahaModelWrapperPallas:
    """JAX/Pallas port of MahaModelWrapper.forward (trained case: self.mus non-empty).

    base_stages : list of (w (Cout, Cin), b (Cout,)) synthetic 1x1-conv+ReLU stages
                  ("densenet121.features" stand-in).
    mus         : dict node_idx -> (num_class, d) class means.
    Ts          : dict node_idx -> (num_class, d, d) class precision matrices.
    """

    def __init__(self, base_stages, mus, Ts, intermediate_nodes, num_class=2,
                 lane=LANE, param_dtype=jnp.float32, tile_s=512):
        self.intermediate_nodes = tuple(intermediate_nodes)
        self.num_class = num_class
        self.param_dtype = jnp.dtype(param_dtype)
        self.tile_s = tile_s

        # Stages past the last hooked node are never consumed -> skip them entirely.
        self._n_run = max(self.intermediate_nodes) + 1
        assert self._n_run <= len(base_stages)

        # Stage weights: zero-pad channels to lane multiples (exact) and pre-transpose to
        # (Cin_p, Cout_p) so the kernel computes x @ W directly.  Bias stays f32.
        self._stages = []
        for w, b in base_stages[:self._n_run]:
            cout, cin = w.shape
            cin_p, cout_p = _round_up(cin, lane), _round_up(cout, lane)
            w_p = _pad_dim(_pad_dim(jnp.asarray(w, jnp.float32).T, 0, cin_p), 1, cout_p)
            b_p = _pad_dim(jnp.asarray(b, jnp.float32).reshape(1, cout), 1, cout_p)
            self._stages.append((w_p.astype(self.param_dtype), b_p))

        # Mahalanobis constants (expanded quadratic form; no symmetry assumption on T):
        #   t_aug = [T_0 | ... | T_{K-1} | V]  with V[:, c] = (T_c + T_c^T) @ mu_c  (lane-padded)
        #   const[c] = mu_c @ T_c @ mu_c^T
        self._maha = []
        for i in self.intermediate_nodes:
            mu = jnp.asarray(mus[i], jnp.float32)
            T = jnp.asarray(Ts[i], jnp.float32)
            K, d = mu.shape
            assert K == num_class
            d_p = _round_up(d, lane)
            assert d_p == self._stages[i][0].shape[1], "hook width must match stage output width"
            mu_p = _pad_dim(mu, 1, d_p)
            T_p = _pad_dim(_pad_dim(T, 1, d_p), 2, d_p)
            t_cat = jnp.transpose(T_p, (1, 0, 2)).reshape(d_p, K * d_p)
            v = jnp.einsum("kde,ke->kd", T_p + jnp.transpose(T_p, (0, 2, 1)), mu_p)  # (K, d_p)
            v_aug = _pad_dim(jnp.transpose(v, (1, 0)), 1, LANE)                      # (d_p, LANE)
            t_aug = jnp.concatenate([t_cat, v_aug], axis=1).astype(self.param_dtype)
            const = jnp.einsum("kd,kde,ke->k", mu_p, T_p, mu_p).reshape(1, K)
            self._maha.append((t_aug, const, d_p))

    def __call__(self, x, softmax=False):
        # TODO(synk): original `if softmax: LL = nn.Softmax(LL)` constructs a module (an
        # upstream bug); only the default softmax=False path is reproduced.
        x = jnp.asarray(x, jnp.float32)
        N, C, H, W = x.shape
        HW = H * W
        K = self.num_class
        c0_p = self._stages[0][0].shape[0]
        cmax_p = max(w.shape[1] for w, _ in self._stages)

        # NCHW -> channels-last ONCE; everything downstream is (N, H*W, C), lane-padded.
        h = jnp.transpose(x, (0, 2, 3, 1)).reshape(N, HW, C)
        h = _pad_dim(h, 2, c0_p).astype(self.param_dtype)

        # ---- VMEM budgeting (v5e 16 MiB scoped default / v7x 64 MiB physical) ----
        const_arrays = [a for wb in self._stages for a in wb] + \
                       [a for t_aug, const, _ in self._maha for a in (t_aug, const)]
        # TODO(synk): pipeline_mode=pl.Buffered(1) on the constant-index blocks would reclaim
        # their second pipeline buffer at DenseNet scale; budgeted for 2x here instead.
        resident_bytes = 2 * _bytes(const_arrays)
        itemsize = self.param_dtype.itemsize
        row_bytes = 2 * c0_p * itemsize + 2 * cmax_p * 4   # dbl-buffered x tile + live f32 acts
        misc_bytes = 2 << 20
        budget = (40 << 20) - resident_bytes - misc_bytes

        ts = min(self.tile_s, _round_up(HW, SUBLANE))
        if budget > 0:
            ts = min(ts, max(SUBLANE, (budget // row_bytes) // SUBLANE * SUBLANE))
        ts = max(SUBLANE, (ts // SUBLANE) * SUBLANE)
        hw_p = _round_up(HW, ts)                # sublane-aligned; padded rows masked in-kernel
        needs_mask = hw_p != HW
        h = _pad_dim(h, 1, hw_p)
        S = hw_p // ts

        vmem_limit = int(min(64 << 20,
                             max(32 << 20,
                                 (resident_bytes + ts * row_bytes + misc_bytes) * 13 // 10)))

        kernel = _make_fused_kernel(
            n_stages=len(self._stages),
            hooked_nodes=self.intermediate_nodes,
            node_dp=tuple(d_p for _, _, d_p in self._maha),
            K=K, inv_hw=1.0 / HW, hw_valid=HW, ts=ts,
            needs_mask=needs_mask, param_dtype=self.param_dtype)

        in_specs = [pl.BlockSpec((1, ts, c0_p), lambda n, s: (n, s, 0))]
        in_specs += [_const_block_spec(a) for a in const_arrays]
        out_specs = [pl.BlockSpec((1, 1, K), lambda n, s: (n, 0, 0))
                     for _ in self.intermediate_nodes]
        out_shape = tuple(jax.ShapeDtypeStruct((N, 1, K), jnp.float32)
                          for _ in self.intermediate_nodes)
        scratch_shapes = [pltpu.VMEM((1, d_p), jnp.float32) for _, _, d_p in self._maha]

        lls = pl.pallas_call(
            kernel,
            out_shape=out_shape,
            grid_spec=pltpu.PrefetchScalarGridSpec(
                num_scalar_prefetch=0,
                grid=(N, S),          # spatial axis last -> per-image mean/score finalization
                in_specs=in_specs,
                out_specs=out_specs,
                scratch_shapes=scratch_shapes),
            compiler_params=pltpu.CompilerParams(
                # TODO(synk): for N==1 on v7x, split the spatial axis into 2 parallel halves
                # (partial means combined outside) so the second TensorCore has work.
                dimension_semantics=("parallel", "arbitrary"),
                vmem_limit_bytes=vmem_limit),
        )(h, *const_arrays)

        return [ll.reshape(N, K) for ll in lls]


# ----------------------------- Pure-JAX reference -----------------------------

def _reference_forward(x, base_stages, mus, Ts, intermediate_nodes):
    acts = {}
    h = x
    for i, (w, b) in enumerate(base_stages):
        hf = jnp.transpose(h, (0, 2, 3, 1))
        y = jnp.maximum(jnp.einsum("nhwc,oc->nhwo", hf, w) + b, 0.0)
        h = jnp.transpose(y, (0, 3, 1, 2))
        if i in intermediate_nodes:
            acts[i] = jnp.mean(h, axis=(2, 3))
    all_LL = []
    for i in intermediate_nodes:
        a = acts[i]
        cols = []
        for c in range(mus[i].shape[0]):
            diff = a - mus[i][c][None, :]
            cols.append(-jnp.sum((diff @ Ts[i][c]) * diff, axis=1, keepdims=True))
        all_LL.append(jnp.concatenate(cols, axis=1))
    return all_LL


# ----------------------------- Main -----------------------------

if __name__ == "__main__":
    key = jax.random.PRNGKey(0)

    N, C_in, H, W = 2, 4, 16, 16
    channels = [C_in, 8, 16, 32]             # synthetic "features" stage widths
    intermediate_nodes = (0, 1, 2)           # analogue of (3, 5, 7, 9, 11) at small scale
    num_class = 2

    # Deterministic synthetic base-model weights.
    base_stages = []
    for s in range(len(channels) - 1):
        key, kw, kb = jax.random.split(key, 3)
        cin, cout = channels[s], channels[s + 1]
        w = jax.random.normal(kw, (cout, cin), jnp.float32) * 0.2
        b = jax.random.normal(kb, (cout,), jnp.float32) * 0.05
        base_stages.append((w, b))

    # Deterministic synthetic Mahalanobis statistics (as if collect_states had run).
    mus, Ts = {}, {}
    for i in intermediate_nodes:
        d = channels[i + 1]
        key, kmu, ka = jax.random.split(key, 3)
        mus[i] = jax.random.normal(kmu, (num_class, d), jnp.float32) * 0.1
        A = jax.random.normal(ka, (num_class, d, d), jnp.float32) * 0.1
        Ts[i] = jnp.einsum("kij,klj->kil", A, A) / d + 1e-2 * jnp.eye(d)[None]  # symmetric PD

    key, kx = jax.random.split(key)
    x = jax.random.normal(kx, (N, C_in, H, W), jnp.float32)

    model = MahaModelWrapperPallas(base_stages, mus, Ts, intermediate_nodes, num_class)
    all_LL = model(x)
    all_LL = jax.block_until_ready(all_LL)

    ref_LL = _reference_forward(x, base_stages, mus, Ts, intermediate_nodes)
    for got, want in zip(all_LL, ref_LL):
        assert got.shape == (N, num_class) and got.dtype == jnp.float32
        assert jnp.allclose(got, want, rtol=1e-4, atol=1e-4), (got, want)

    print("KERNEL_OK")
</pallas_src>

<mosaic_0001>
module attributes {stable_mosaic.version = 11 : i64} {
  func.func @kernel(%arg0: i32, %arg1: i32, %arg2: memref<1x256x128xf32, #tpu.memory_space<vmem>>, %arg3: memref<128x128xf32, #tpu.memory_space<vmem>>, %arg4: memref<1x128xf32, #tpu.memory_space<vmem>>, %arg5: memref<128x128xf32, #tpu.memory_space<vmem>>, %arg6: memref<1x128xf32, #tpu.memory_space<vmem>>, %arg7: memref<128x128xf32, #tpu.memory_space<vmem>>, %arg8: memref<1x128xf32, #tpu.memory_space<vmem>>, %arg9: memref<128x384xf32, #tpu.memory_space<vmem>>, %arg10: memref<1x2xf32, #tpu.memory_space<vmem>>, %arg11: memref<128x384xf32, #tpu.memory_space<vmem>>, %arg12: memref<1x2xf32, #tpu.memory_space<vmem>>, %arg13: memref<128x384xf32, #tpu.memory_space<vmem>>, %arg14: memref<1x2xf32, #tpu.memory_space<vmem>>, %arg15: memref<1x1x2xf32, #tpu.memory_space<vmem>>, %arg16: memref<1x1x2xf32, #tpu.memory_space<vmem>>, %arg17: memref<1x1x2xf32, #tpu.memory_space<vmem>>, %arg18: memref<1x128xf32, #tpu.memory_space<vmem>>, %arg19: memref<1x128xf32, #tpu.memory_space<vmem>>, %arg20: memref<1x128xf32, #tpu.memory_space<vmem>>) attributes {dimension_semantics = [#tpu.dimension_semantics<parallel>, #tpu.dimension_semantics<arbitrary>], iteration_bounds = array<i64: 2, 1>, scalar_prefetch = 0 : i64, scratch_operands = 3 : i64, tpu.core_type = #tpu.core_type<tc>, window_params = [{transform_indices = @transform_0, window_bounds = array<i64: 1, 256, 128>}, {pipeline_mode = #tpu.pipeline_mode<synchronous>, transform_indices = @transform_1, window_bounds = array<i64: 128, 128>}, {pipeline_mode = #tpu.pipeline_mode<synchronous>, transform_indices = @transform_2, window_bounds = array<i64: 1, 128>}, {pipeline_mode = #tpu.pipeline_mode<synchronous>, transform_indices = @transform_3, window_bounds = array<i64: 128, 128>}, {pipeline_mode = #tpu.pipeline_mode<synchronous>, transform_indices = @transform_4, window_bounds = array<i64: 1, 128>}, {pipeline_mode = #tpu.pipeline_mode<synchronous>, transform_indices = @transform_5, window_bounds = array<i64: 128, 128>}, {pipeline_mode = #tpu.pipeline_mode<synchronous>, transform_indices = @transform_6, window_bounds = array<i64: 1, 128>}, {pipeline_mode = #tpu.pipeline_mode<synchronous>, transform_indices = @transform_7, window_bounds = array<i64: 128, 384>}, {pipeline_mode = #tpu.pipeline_mode<synchronous>, transform_indices = @transform_8, window_bounds = array<i64: 1, 2>}, {pipeline_mode = #tpu.pipeline_mode<synchronous>, transform_indices = @transform_9, window_bounds = array<i64: 128, 384>}, {pipeline_mode = #tpu.pipeline_mode<synchronous>, transform_indices = @transform_10, window_bounds = array<i64: 1, 2>}, {pipeline_mode = #tpu.pipeline_mode<synchronous>, transform_indices = @transform_11, window_bounds = array<i64: 128, 384>}, {pipeline_mode = #tpu.pipeline_mode<synchronous>, transform_indices = @transform_12, window_bounds = array<i64: 1, 2>}, {transform_indices = @transform_13, window_bounds = array<i64: 1, 1, 2>}, {transform_indices = @transform_14, window_bounds = array<i64: 1, 1, 2>}, {transform_indices = @transform_15, window_bounds = array<i64: 1, 1, 2>}]} {
    %c0_i32 = arith.constant 0 : i32
    %0 = arith.cmpi eq, %arg1, %c0_i32 : i32
    %1 = arith.extui %0 : i1 to i32
    %c0_i32_0 = arith.constant 0 : i32
    %2 = arith.cmpi ne, %1, %c0_i32_0 : i32
    scf.if %2 {
      %cst_40 = arith.constant 0.000000e+00 : f32
      %50 = vector.broadcast %cst_40 : f32 to vector<1x128xf32>
      %c0_41 = arith.constant 0 : index
      %c0_42 = arith.constant 0 : index
      %51 = vector.load %arg18[%c0_41, %c0_42] : memref<1x128xf32, #tpu.memory_space<vmem>>, vector<1x128xf32>
      tpu.vector_store %arg18[%c0_41, %c0_42], %50 {strides = array<i32>} : memref<1x128xf32, #tpu.memory_space<vmem>>, vector<1x128xf32>,
      %cst_43 = arith.constant 0.000000e+00 : f32
      %52 = vector.broadcast %cst_43 : f32 to vector<1x128xf32>
      %c0_44 = arith.constant 0 : index
      %c0_45 = arith.constant 0 : index
      %53 = vector.load %arg19[%c0_44, %c0_45] : memref<1x128xf32, #tpu.memory_space<vmem>>, vector<1x128xf32>
      tpu.vector_store %arg19[%c0_44, %c0_45], %52 {strides = array<i32>} : memref<1x128xf32, #tpu.memory_space<vmem>>, vector<1x128xf32>,
      %cst_46 = arith.constant 0.000000e+00 : f32
      %54 = vector.broadcast %cst_46 : f32 to vector<1x128xf32>
      %c0_47 = arith.constant 0 : index
      %c0_48 = arith.constant 0 : index
      %55 = vector.load %arg20[%c0_47, %c0_48] : memref<1x128xf32, #tpu.memory_space<vmem>>, vector<1x128xf32>
      tpu.vector_store %arg20[%c0_47, %c0_48], %54 {strides = array<i32>} : memref<1x128xf32, #tpu.memory_space<vmem>>, vector<1x128xf32>,
    } else {
    }
    %c0 = arith.constant 0 : index
    %c0_1 = arith.constant 0 : index
    %c0_2 = arith.constant 0 : index
    %3 = vector.load %arg2[%c0, %c0_1, %c0_2] : memref<1x256x128xf32, #tpu.memory_space<vmem>>, vector<1x256x128xf32>
    %4 = vector.shape_cast %3 : vector<1x256x128xf32> to vector<256x128xf32>
    %c0_3 = arith.constant 0 : index
    %c0_4 = arith.constant 0 : index
    %5 = vector.load %arg3[%c0_3, %c0_4] : memref<128x128xf32, #tpu.memory_space<vmem>>, vector<128x128xf32>
    %cst = arith.constant dense<0.000000e+00> : vector<256x128xf32>
    %6 = tpu.matmul %4, %5, %cst {dimension_numbers = #tpu.dot_dimension_numbers<[1], [0], [0], [1], [0, 0, 1, 1], [], []>} : vector<256x128xf32>, vector<128x128xf32>, vector<256x128xf32> -> vector<256x128xf32>
    %c0_5 = arith.constant 0 : index
    %c0_6 = arith.constant 0 : index
    %7 = vector.load %arg4[%c0_5, %c0_6] : memref<1x128xf32, #tpu.memory_space<vmem>>, vector<1x128xf32>
    %8 = vector.broadcast %7 : vector<1x128xf32> to vector<256x128xf32>
    %9 = arith.addf %6, %8 : vector<256x128xf32>
    %cst_7 = arith.constant 0.000000e+00 : f32
    %10 = vector.broadcast %cst_7 : f32 to vector<256x128xf32>
    %11 = arith.maximumf %9, %10 : vector<256x128xf32>
    %c0_8 = arith.constant 0 : index
    %c0_9 = arith.constant 0 : index
    %12 = vector.load %arg18[%c0_8, %c0_9] : memref<1x128xf32, #tpu.memory_space<vmem>>, vector<1x128xf32>
    %cst_10 = arith.constant dense<0.000000e+00> : vector<128xf32>
    %13 = vector.multi_reduction <add>, %11, %cst_10 [0] : vector<256x128xf32> to vector<128xf32>
    %14 = vector.shape_cast %13 : vector<128xf32> to vector<1x128xf32>
    %cst_11 = arith.constant 3.906250e-03 : f32
    %15 = vector.broadcast %cst_11 : f32 to vector<1x128xf32>
    %16 = arith.mulf %14, %15 : vector<1x128xf32>
    %17 = arith.addf %12, %16 : vector<1x128xf32>
    %c0_12 = arith.constant 0 : index
    %c0_13 = arith.constant 0 : index
    %18 = vector.load %arg18[%c0_12, %c0_13] : memref<1x128xf32, #tpu.memory_space<vmem>>, vector<1x128xf32>
    tpu.vector_store %arg18[%c0_12, %c0_13], %17 {strides = array<i32>} : memref<1x128xf32, #tpu.memory_space<vmem>>, vector<1x128xf32>,
    %c0_14 = arith.constant 0 : index
    %c0_15 = arith.constant 0 : index
    %19 = vector.load %arg5[%c0_14, %c0_15] : memref<128x128xf32, #tpu.memory_space<vmem>>, vector<128x128xf32>
    %cst_16 = arith.constant dense<0.000000e+00> : vector<256x128xf32>
    %20 = tpu.matmul %11, %19, %cst_16 {dimension_numbers = #tpu.dot_dimension_numbers<[1], [0], [0], [1], [0, 0, 1, 1], [], []>} : vector<256x128xf32>, vector<128x128xf32>, vector<256x128xf32> -> vector<256x128xf32>
    %c0_17 = arith.constant 0 : index
    %c0_18 = arith.constant 0 : index
    %21 = vector.load %arg6[%c0_17, %c0_18] : memref<1x128xf32, #tpu.memory_space<vmem>>, vector<1x128xf32>
    %22 = vector.broadcast %21 : vector<1x128xf32> to vector<256x128xf32>
    %23 = arith.addf %20, %22 : vector<256x128xf32>
    %cst_19 = arith.constant 0.000000e+00 : f32
    %24 = vector.broadcast %cst_19 : f32 to vector<256x128xf32>
    %25 = arith.maximumf %23, %24 : vector<256x128xf32>
    %c0_20 = arith.constant 0 : index
    %c0_21 = arith.constant 0 : index
    %26 = vector.load %arg19[%c0_20, %c0_21] : memref<1x128xf32, #tpu.memory_space<vmem>>, vector<1x128xf32>
    %cst_22 = arith.constant dense<0.000000e+00> : vector<128xf32>
    %27 = vector.multi_reduction <add>, %25, %cst_22 [0] : vector<256x128xf32> to vector<128xf32>
    %28 = vector.shape_cast %27 : vector<128xf32> to vector<1x128xf32>
    %cst_23 = arith.constant 3.906250e-03 : f32
    %29 = vector.broadcast %cst_23 : f32 to vector<1x128xf32>
    %30 = arith.mulf %28, %29 : vector<1x128xf32>
    %31 = arith.addf %26, %30 : vector<1x128xf32>
    %c0_24 = arith.constant 0 : index
    %c0_25 = arith.constant 0 : index
    %32 = vector.load %arg19[%c0_24, %c0_25] : memref<1x128xf32, #tpu.memory_space<vmem>>, vector<1x128xf32>
    tpu.vector_store %arg19[%c0_24, %c0_25], %31 {strides = array<i32>} : memref<1x128xf32, #tpu.memory_space<vmem>>, vector<1x128xf32>,
    %c0_26 = arith.constant 0 : index
    %c0_27 = arith.constant 0 : index
    %33 = vector.load %arg7[%c0_26, %c0_27] : memref<128x128xf32, #tpu.memory_space<vmem>>, vector<128x128xf32>
    %cst_28 = arith.constant dense<0.000000e+00> : vector<256x128xf32>
    %34 = tpu.matmul %25, %33, %cst_28 {dimension_numbers = #tpu.dot_dimension_numbers<[1], [0], [0], [1], [0, 0, 1, 1], [], []>} : vector<256x128xf32>, vector<128x128xf32>, vector<256x128xf32> -> vector<256x128xf32>
    %c0_29 = arith.constant 0 : index
    %c0_30 = arith.constant 0 : index
    %35 = vector.load %arg8[%c0_29, %c0_30] : memref<1x128xf32, #tpu.memory_space<vmem>>, vector<1x128xf32>
    %36 = vector.broadcast %35 : vector<1x128xf32> to vector<256x128xf32>
    %37 = arith.addf %34, %36 : vector<256x128xf32>
    %cst_31 = arith.constant 0.000000e+00 : f32
    %38 = vector.broadcast %cst_31 : f32 to vector<256x128xf32>
    %39 = arith.maximumf %37, %38 : vector<256x128xf32>
    %c0_32 = arith.constant 0 : index
    %c0_33 = arith.constant 0 : index
    %40 = vector.load %arg20[%c0_32, %c0_33] : memref<1x128xf32, #tpu.memory_space<vmem>>, vector<1x128xf32>
    %cst_34 = arith.constant dense<0.000000e+00> : vector<128xf32>
    %41 = vector.multi_reduction <add>, %39, %cst_34 [0] : vector<256x128xf32> to vector<128xf32>
    %42 = vector.shape_cast %41 : vector<128xf32> to vector<1x128xf32>
    %cst_35 = arith.constant 3.906250e-03 : f32
    %43 = vector.broadcast %cst_35 : f32 to vector<1x128xf32>
    %44 = arith.mulf %42, %43 : vector<1x128xf32>
    %45 = arith.addf %40, %44 : vector<1x128xf32>
    %c0_36 = arith.constant 0 : index
    %c0_37 = arith.constant 0 : index
    %46 = vector.load %arg20[%c0_36, %c0_37] : memref<1x128xf32, #tpu.memory_space<vmem>>, vector<1x128xf32>
    tpu.vector_store %arg20[%c0_36, %c0_37], %45 {strides = array<i32>} : memref<1x128xf32, #tpu.memory_space<vmem>>, vector<1x128xf32>,
    %c0_i32_38 = arith.constant 0 : i32
    %47 = arith.cmpi eq, %arg1, %c0_i32_38 : i32
    %48 = arith.extui %47 : i1 to i32
    %c0_i32_39 = arith.constant 0 : i32
    %49 = arith.cmpi ne, %48, %c0_i32_39 : i32
    scf.if %49 {
      %c0_40 = arith.constant 0 : index
      %c0_41 = arith.constant 0 : index
      %50 = vector.load %arg18[%c0_40, %c0_41] : memref<1x128xf32, #tpu.memory_space<vmem>>, vector<1x128xf32>
      %c0_42 = arith.constant 0 : index
      %c0_43 = arith.constant 0 : index
      %51 = vector.load %arg9[%c0_42, %c0_43] : memref<128x384xf32, #tpu.memory_space<vmem>>, vector<128x384xf32>
      %cst_44 = arith.constant dense<0.000000e+00> : vector<1x384xf32>
      %52 = tpu.matmul %50, %51, %cst_44 {dimension_numbers = #tpu.dot_dimension_numbers<[1], [0], [0], [1], [0, 0, 1, 1], [], []>} : vector<1x128xf32>, vector<128x384xf32>, vector<1x384xf32> -> vector<1x384xf32>
      %53 = vector.extract_strided_slice %52 {offsets = [0, 0], sizes = [1, 256], strides = [1, 1]} : vector<1x384xf32> to vector<1x256xf32>
      %54 = vector.shape_cast %53 : vector<1x256xf32> to vector<1x2x128xf32>
      %55 = vector.extract_strided_slice %52 {offsets = [0, 256], sizes = [1, 2], strides = [1, 1]} : vector<1x384xf32> to vector<1x2xf32>
      %56 = vector.shape_cast %50 : vector<1x128xf32> to vector<1x1x128xf32>
      %57 = vector.broadcast %56 : vector<1x1x128xf32> to vector<1x2x128xf32>
      %58 = arith.mulf %54, %57 : vector<1x2x128xf32>
      %cst_45 = arith.constant dense<0.000000e+00> : vector<1x2xf32>
      %59 = vector.multi_reduction <add>, %58, %cst_45 [2] : vector<1x2x128xf32> to vector<1x2xf32>
      %60 = arith.subf %55, %59 : vector<1x2xf32>
      %c0_46 = arith.constant 0 : index
      %c0_47 = arith.constant 0 : index
      %61 = vector.load %arg10[%c0_46, %c0_47] : memref<1x2xf32, #tpu.memory_space<vmem>>, vector<1x2xf32>
      %62 = arith.subf %60, %61 : vector<1x2xf32>
      %63 = vector.shape_cast %62 : vector<1x2xf32> to vector<1x1x2xf32>
      %c0_48 = arith.constant 0 : index
      %c0_49 = arith.constant 0 : index
      %c0_50 = arith.constant 0 : index
      %64 = vector.load %arg15[%c0_48, %c0_49, %c0_50] : memref<1x1x2xf32, #tpu.memory_space<vmem>>, vector<1x1x2xf32>
      tpu.vector_store %arg15[%c0_48, %c0_49, %c0_50], %63 {strides = array<i32>} : memref<1x1x2xf32, #tpu.memory_space<vmem>>, vector<1x1x2xf32>,
      %c0_51 = arith.constant 0 : index
      %c0_52 = arith.constant 0 : index
      %65 = vector.load %arg19[%c0_51, %c0_52] : memref<1x128xf32, #tpu.memory_space<vmem>>, vector<1x128xf32>
      %c0_53 = arith.constant 0 : index
      %c0_54 = arith.constant 0 : index
      %66 = vector.load %arg11[%c0_53, %c0_54] : memref<128x384xf32, #tpu.memory_space<vmem>>, vector<128x384xf32>
      %cst_55 = arith.constant dense<0.000000e+00> : vector<1x384xf32>
      %67 = tpu.matmul %65, %66, %cst_55 {dimension_numbers = #tpu.dot_dimension_numbers<[1], [0], [0], [1], [0, 0, 1, 1], [], []>} : vector<1x128xf32>, vector<128x384xf32>, vector<1x384xf32> -> vector<1x384xf32>
      %68 = vector.extract_strided_slice %67 {offsets = [0, 0], sizes = [1, 256], strides = [1, 1]} : vector<1x384xf32> to vector<1x256xf32>
      %69 = vector.shape_cast %68 : vector<1x256xf32> to vector<1x2x128xf32>
      %70 = vector.extract_strided_slice %67 {offsets = [0, 256], sizes = [1, 2], strides = [1, 1]} : vector<1x384xf32> to vector<1x2xf32>
      %71 = vector.shape_cast %65 : vector<1x128xf32> to vector<1x1x128xf32>
      %72 = vector.broadcast %71 : vector<1x1x128xf32> to vector<1x2x128xf32>
      %73 = arith.mulf %69, %72 : vector<1x2x128xf32>
      %cst_56 = arith.constant dense<0.000000e+00> : vector<1x2xf32>
      %74 = vector.multi_reduction <add>, %73, %cst_56 [2] : vector<1x2x128xf32> to vector<1x2xf32>
      %75 = arith.subf %70, %74 : vector<1x2xf32>
      %c0_57 = arith.constant 0 : index
      %c0_58 = arith.constant 0 : index
      %76 = vector.load %arg12[%c0_57, %c0_58] : memref<1x2xf32, #tpu.memory_space<vmem>>, vector<1x2xf32>
      %77 = arith.subf %75, %76 : vector<1x2xf32>
      %78 = vector.shape_cast %77 : vector<1x2xf32> to vector<1x1x2xf32>
      %c0_59 = arith.constant 0 : index
      %c0_60 = arith.constant 0 : index
      %c0_61 = arith.constant 0 : index
      %79 = vector.load %arg16[%c0_59, %c0_60, %c0_61] : memref<1x1x2xf32, #tpu.memory_space<vmem>>, vector<1x1x2xf32>
      tpu.vector_store %arg16[%c0_59, %c0_60, %c0_61], %78 {strides = array<i32>} : memref<1x1x2xf32, #tpu.memory_space<vmem>>, vector<1x1x2xf32>,
      %c0_62 = arith.constant 0 : index
      %c0_63 = arith.constant 0 : index
      %80 = vector.load %arg20[%c0_62, %c0_63] : memref<1x128xf32, #tpu.memory_space<vmem>>, vector<1x128xf32>
      %c0_64 = arith.constant 0 : index
      %c0_65 = arith.constant 0 : index
      %81 = vector.load %arg13[%c0_64, %c0_65] : memref<128x384xf32, #tpu.memory_space<vmem>>, vector<128x384xf32>
      %cst_66 = arith.constant dense<0.000000e+00> : vector<1x384xf32>
      %82 = tpu.matmul %80, %81, %cst_66 {dimension_numbers = #tpu.dot_dimension_numbers<[1], [0], [0], [1], [0, 0, 1, 1], [], []>} : vector<1x128xf32>, vector<128x384xf32>, vector<1x384xf32> -> vector<1x384xf32>
      %83 = vector.extract_strided_slice %82 {offsets = [0, 0], sizes = [1, 256], strides = [1, 1]} : vector<1x384xf32> to vector<1x256xf32>
      %84 = vector.shape_cast %83 : vector<1x256xf32> to vector<1x2x128xf32>
      %85 = vector.extract_strided_slice %82 {offsets = [0, 256], sizes = [1, 2], strides = [1, 1]} : vector<1x384xf32> to vector<1x2xf32>
      %86 = vector.shape_cast %80 : vector<1x128xf32> to vector<1x1x128xf32>
      %87 = vector.broadcast %86 : vector<1x1x128xf32> to vector<1x2x128xf32>
      %88 = arith.mulf %84, %87 : vector<1x2x128xf32>
      %cst_67 = arith.constant dense<0.000000e+00> : vector<1x2xf32>
      %89 = vector.multi_reduction <add>, %88, %cst_67 [2] : vector<1x2x128xf32> to vector<1x2xf32>
      %90 = arith.subf %85, %89 : vector<1x2xf32>
      %c0_68 = arith.constant 0 : index
      %c0_69 = arith.constant 0 : index
      %91 = vector.load %arg14[%c0_68, %c0_69] : memref<1x2xf32, #tpu.memory_space<vmem>>, vector<1x2xf32>
      %92 = arith.subf %90, %91 : vector<1x2xf32>
      %93 = vector.shape_cast %92 : vector<1x2xf32> to vector<1x1x2xf32>
      %c0_70 = arith.constant 0 : index
      %c0_71 = arith.constant 0 : index
      %c0_72 = arith.constant 0 : index
      %94 = vector.load %arg17[%c0_70, %c0_71, %c0_72] : memref<1x1x2xf32, #tpu.memory_space<vmem>>, vector<1x1x2xf32>
      tpu.vector_store %arg17[%c0_70, %c0_71, %c0_72], %93 {strides = array<i32>} : memref<1x1x2xf32, #tpu.memory_space<vmem>>, vector<1x1x2xf32>,
    } else {
    }
    return
  }
  func.func @transform_0(%arg0: i32, %arg1: i32) -> (i32, i32, i32) {
    %c0_i32 = arith.constant 0 : i32
    %c0_i32_0 = arith.constant 0 : i32
    return %arg0, %arg1, %c0_i32 : i32, i32, i32
  }
  func.func @transform_1(%arg0: i32, %arg1: i32) -> (i32, i32) {
    %c0_i32 = arith.constant 0 : i32
    %c0_i32_0 = arith.constant 0 : i32
    %c0_i32_1 = arith.constant 0 : i32
    return %c0_i32, %c0_i32_0 : i32, i32
  }
  func.func @transform_2(%arg0: i32, %arg1: i32) -> (i32, i32) {
    %c0_i32 = arith.constant 0 : i32
    %c0_i32_0 = arith.constant 0 : i32
    %c0_i32_1 = arith.constant 0 : i32
    return %c0_i32, %c0_i32_0 : i32, i32
  }
  func.func @transform_3(%arg0: i32, %arg1: i32) -> (i32, i32) {
    %c0_i32 = arith.constant 0 : i32
    %c0_i32_0 = arith.constant 0 : i32
    %c0_i32_1 = arith.constant 0 : i32
    return %c0_i32, %c0_i32_0 : i32, i32
  }
  func.func @transform_4(%arg0: i32, %arg1: i32) -> (i32, i32) {
    %c0_i32 = arith.constant 0 : i32
    %c0_i32_0 = arith.constant 0 : i32
    %c0_i32_1 = arith.constant 0 : i32
    return %c0_i32, %c0_i32_0 : i32, i32
  }
  func.func @transform_5(%arg0: i32, %arg1: i32) -> (i32, i32) {
    %c0_i32 = arith.constant 0 : i32
    %c0_i32_0 = arith.constant 0 : i32
    %c0_i32_1 = arith.constant 0 : i32
    return %c0_i32, %c0_i32_0 : i32, i32
  }
  func.func @transform_6(%arg0: i32, %arg1: i32) -> (i32, i32) {
    %c0_i32 = arith.constant 0 : i32
    %c0_i32_0 = arith.constant 0 : i32
    %c0_i32_1 = arith.constant 0 : i32
    return %c0_i32, %c0_i32_0 : i32, i32
  }
  func.func @transform_7(%arg0: i32, %arg1: i32) -> (i32, i32) {
    %c0_i32 = arith.constant 0 : i32
    %c0_i32_0 = arith.constant 0 : i32
    %c0_i32_1 = arith.constant 0 : i32
    return %c0_i32, %c0_i32_0 : i32, i32
  }
  func.func @transform_8(%arg0: i32, %arg1: i32) -> (i32, i32) {
    %c0_i32 = arith.constant 0 : i32
    %c0_i32_0 = arith.constant 0 : i32
    %c0_i32_1 = arith.constant 0 : i32
    return %c0_i32, %c0_i32_0 : i32, i32
  }
  func.func @transform_9(%arg0: i32, %arg1: i32) -> (i32, i32) {
    %c0_i32 = arith.constant 0 : i32
    %c0_i32_0 = arith.constant 0 : i32
    %c0_i32_1 = arith.constant 0 : i32
    return %c0_i32, %c0_i32_0 : i32, i32
  }
  func.func @transform_10(%arg0: i32, %arg1: i32) -> (i32, i32) {
    %c0_i32 = arith.constant 0 : i32
    %c0_i32_0 = arith.constant 0 : i32
    %c0_i32_1 = arith.constant 0 : i32
    return %c0_i32, %c0_i32_0 : i32, i32
  }
  func.func @transform_11(%arg0: i32, %arg1: i32) -> (i32, i32) {
    %c0_i32 = arith.constant 0 : i32
    %c0_i32_0 = arith.constant 0 : i32
    %c0_i32_1 = arith.constant 0 : i32
    return %c0_i32, %c0_i32_0 : i32, i32
  }
  func.func @transform_12(%arg0: i32, %arg1: i32) -> (i32, i32) {
    %c0_i32 = arith.constant 0 : i32
    %c0_i32_0 = arith.constant 0 : i32
    %c0_i32_1 = arith.constant 0 : i32
    return %c0_i32, %c0_i32_0 : i32, i32
  }
  func.func @transform_13(%arg0: i32, %arg1: i32) -> (i32, i32, i32) {
    %c0_i32 = arith.constant 0 : i32
    %c0_i32_0 = arith.constant 0 : i32
    %c0_i32_1 = arith.constant 0 : i32
    return %arg0, %c0_i32, %c0_i32_0 : i32, i32, i32
  }
  func.func @transform_14(%arg0: i32, %arg1: i32) -> (i32, i32, i32) {
    %c0_i32 = arith.constant 0 : i32
    %c0_i32_0 = arith.constant 0 : i32
    %c0_i32_1 = arith.constant 0 : i32
    return %arg0, %c0_i32, %c0_i32_0 : i32, i32, i32
  }
  func.func @transform_15(%arg0: i32, %arg1: i32) -> (i32, i32, i32) {
    %c0_i32 = arith.constant 0 : i32
    %c0_i32_0 = arith.constant 0 : i32
    %c0_i32_1 = arith.constant 0 : i32
    return %arg0, %c0_i32, %c0_i32_0 : i32, i32, i32
  }
}

</mosaic_0001>

<llo_original>
// kernel: tpu_custom_call.1
$region0: #{tpu_custom_call.1}
  #allocation0 [shape = 'u32[]', space=smem, size = 0x4, offset = 0x4, fixed_abs, tag = 'smem constant byte address 0x4 - core index']
  #allocation1 [shape = 'u32[144,128]{1,0:T(1,128)}', space=vmem, size = 0x12000, scoped, tag = 'internal scratch']
  #allocation2 [shape = 'f32[1,128]{1,0:T(1,128)}', space=vmem, size = 0x200, scoped, tag = 'scratch operand']
  #allocation3 [shape = 'f32[1,128]{1,0:T(1,128)}', space=vmem, size = 0x200, scoped, tag = 'scratch operand']
  #allocation4 [shape = 'f32[1,128]{1,0:T(1,128)}', space=vmem, size = 0x200, scoped, tag = 'scratch operand']
  %s0 = inlined_call_operand.hbm [shape: f32[2,256,128], index: 0, kind: input, shape index: {}]
  %s1 = inlined_call_operand.hbm [shape: f32[128,128], index: 1, kind: input, shape index: {}]
  %s2 = inlined_call_operand.vmem [shape: f32[1,128], index: 2, kind: input, shape index: {}]
  %s3 = inlined_call_operand.hbm [shape: f32[128,128], index: 3, kind: input, shape index: {}]
  %s4 = inlined_call_operand.vmem [shape: f32[1,128], index: 4, kind: input, shape index: {}]
  %s5 = inlined_call_operand.hbm [shape: f32[128,128], index: 5, kind: input, shape index: {}]
  %s6 = inlined_call_operand.vmem [shape: f32[1,128], index: 6, kind: input, shape index: {}]
  %s7 = inlined_call_operand.hbm [shape: f32[128,384], index: 7, kind: input, shape index: {}]
  %s8 = inlined_call_operand.vmem [shape: f32[1,2], index: 8, kind: input, shape index: {}]
  %s9 = inlined_call_operand.hbm [shape: f32[128,384], index: 9, kind: input, shape index: {}]
  %s10 = inlined_call_operand.vmem [shape: f32[1,2], index: 10, kind: input, shape index: {}]
  %s11 = inlined_call_operand.hbm [shape: f32[128,384], index: 11, kind: input, shape index: {}]
  %s12 = inlined_call_operand.vmem [shape: f32[1,2], index: 12, kind: input, shape index: {}]
  %s13 = inlined_call_operand.hbm [shape: f32[2,1,2], index: 13, kind: output, shape index: {0}]
  %s14 = inlined_call_operand.hbm [shape: f32[2,1,2], index: 14, kind: output, shape index: {1}]
  %s15 = inlined_call_operand.hbm [shape: f32[2,1,2], index: 15, kind: output, shape index: {2}]
  %16 = xla_tuple %s13, %s14, %s15
  %s17 = sld [smem:[#allocation0]]
  $region137: #{tpu_custom_call.1} parent=0
    _
  %s19 = ssub.s32 1, %s17
  %s20 = scalar_select 0, %s19, %s17
  $region1: #{tpu_custom_call.1} parent=0
    #allocation5 [shape = 'u8[262144]{0}', space=vmem, size = 0x40000, scoped, tag = 'input window, operand 0']
    #allocation6 [shape = 's32[2]{0}', space=sflag, size = 0x8, scoped, tag = 'scoped memory for tpu_custom_call.1']
    #allocation7 [shape = 's32[2]{0}', space=sflag, size = 0x8, scoped, tag = 'scoped memory for tpu_custom_call.1']
    #allocation8 [shape = 'u8[65536]{0}', space=vmem, size = 0x10000, scoped, tag = 'input window, operand 1, single buffered']
    #allocation9 [shape = 's32[1]{0}', space=sflag, size = 0x4, scoped, tag = 'scoped memory for tpu_custom_call.1']
    #allocation10 [shape = 'u8[65536]{0}', space=vmem, size = 0x10000, scoped, tag = 'input window, operand 3, single buffered']
    #allocation11 [shape = 'u8[65536]{0}', space=vmem, size = 0x10000, scoped, tag = 'input window, operand 5, single buffered']
    #allocation12 [shape = 's32[1]{0}', space=sflag, size = 0x4, scoped, tag = 'scoped memory for tpu_custom_call.1']
    #allocation13 [shape = 'u8[196608]{0}', space=vmem, size = 0x30000, scoped, tag = 'input window, operand 7, single buffered']
    #allocation14 [shape = 'u8[196608]{0}', space=vmem, size = 0x30000, scoped, tag = 'input window, operand 9, single buffered']
    #allocation15 [shape = 's32[1]{0}', space=sflag, size = 0x4, scoped, tag = 'scoped memory for tpu_custom_call.1']
    #allocation16 [shape = 'u8[196608]{0}', space=vmem, size = 0x30000, scoped, tag = 'input window, operand 11, single buffered']
    #allocation17 [shape = 'u8[1024]{0}', space=vmem, size = 0x400, scoped, tag = 'output window, operand 0']
    #allocation18 [shape = 'u8[1024]{0}', space=vmem, size = 0x400, scoped, tag = 'output window, operand 1']
    #allocation19 [shape = 's32[2]{0}', space=sflag, size = 0x8, scoped, tag = 'scoped memory for tpu_custom_call.1']
    #allocation20 [shape = 'u8[1024]{0}', space=vmem, size = 0x400, scoped, tag = 'output window, operand 2']
    %21 = vsyncpa [#allocation6], 0
    %s22 = scalar_lea.sflag [#allocation6], 1
    %23 = vsyncpa %s22, 0
    %24 = vsyncpa [#allocation9], 0
    %25 = vsyncpa [#allocation12], 0
    %26 = vsyncpa [#allocation15], 0
    %27 = vsyncpa [#allocation7], 0
    %s28 = scalar_lea.sflag [#allocation7], 1
    %29 = vsyncpa %s28, 0
    %30 = vsyncpa [#allocation19], 0
    %s31 = scalar_lea.sflag [#allocation19], 1
    %32 = vsyncpa %s31, 0
    loop: start=0, step=1, limit=4
    $region2: #{tpu_custom_call.1} parent=1 // loop_pre_header
      _
    $region3: #{tpu_custom_call.1} parent=1 // loop_header
      %s34 = sphi 0, %s38
      %p35 = scmp.ge.s32.totalorder %s34, 4
      %s41 = sphi 0, %s53
      %s42 = sphi 0, %s49
      %s43 = sphi 0, %s41
      %s44 = sphi 0, %s42
      %s45 = sphi 0, %s43
      %s46 = sphi 0, %s44
      %s58 = sphi 0, %s60
      %s61 = sphi 0, %s58
      %s62 = sphi 0, %s61
      %s78 = sphi 0, %s62
      %s82 = sphi 0, %s82
      %s84 = sphi 0, %s82
      %s85 = sphi 0, %s84
      %s99 = sphi 0, %s85
      %s103 = sphi 0, %s103
      %s105 = sphi 0, %s103
      %s106 = sphi 0, %s105
      %s120 = sphi 0, %s106
      %s124 = sphi 0, %s124
      %s126 = sphi 0, %s124
      %s127 = sphi 0, %s126
      %s141 = sphi 0, %s127
      %s145 = sphi 0, %s145
      %s147 = sphi 0, %s145
      %s148 = sphi 0, %s147
      %s162 = sphi 0, %s148
      %s166 = sphi 0, %s166
      %s168 = sphi 0, %s166
      %s169 = sphi 0, %s168
      %s183 = sphi 0, %s169
      %s187 = sphi 0, %s187
      %s189 = sphi 0, %s187
      %s190 = sphi 0, %s189
      %s204 = sphi 0, %s190
      %s208 = sphi 0, %s208
      %s210 = sphi 0, %s208
      %s211 = sphi 0, %s210
      %s225 = sphi 0, %s211
      %s229 = sphi 0, %s229
      %s231 = sphi 0, %s229
      %s232 = sphi 0, %s231
      %s246 = sphi 0, %s232
      %s250 = sphi 0, %s250
      %s252 = sphi 0, %s250
      %s253 = sphi 0, %s252
      %s267 = sphi 0, %s253
      %s271 = sphi 0, %s271
      %s273 = sphi 0, %s271
      %s274 = sphi 0, %s273
      %s288 = sphi 0, %s274
      %s292 = sphi 0, %s292
      %s294 = sphi 0, %s292
      %s295 = sphi 0, %s294
      %s309 = sphi 0, %s295
      %s313 = sphi 0, %s313
      %s315 = sphi 0, %s313
      %s316 = sphi 0, %s315
      %s330 = sphi 0, %s316
      %s336 = sphi 0, %s338
      %s339 = sphi 0, %s336
      %s340 = sphi 0, %s339
      %s356 = sphi 0, %s340
      %s362 = sphi 0, %s364
      %s365 = sphi 0, %s362
      %s366 = sphi 0, %s365
      %s382 = sphi 0, %s366
      %s388 = sphi 0, %s390
      %s391 = sphi 0, %s388
      %s392 = sphi 0, %s391
      %s408 = sphi 0, %s392
    $region4: #{tpu_custom_call.1} parent=1 // loop_header_branch
      %37 = sbr.rel (%p35) target = $region8
    $region5: #{tpu_custom_call.1} parent=1 // loop_body
      %s39 = ssub.s32 %s34, 1
      %s40 = ssub.s32 %s34, 2
      %s47 = sadd.s32 1, %s42
      %p48 = scmp.ge.s32.totalorder %s47, 1
      %s49 = scalar_select %p48, 0, %s47
      %s50 = sadd.s32 1, %s41
      %s51 = scalar_select %p48, %s50, %s41
      %p52 = scmp.ge.s32.totalorder %s51, 2
      %s53 = scalar_select %p52, 0, %s51
      %s54 = ssub.s32 %s41, %s53
      %s55 = ssub.s32 %s42, %s49
      %s56 = sor.u32 %s54, %s55
      %p57 = scmp.eq.s32.totalorder %s56, 0
      %s59 = sadd.s32 %s58, 1
      %s60 = scalar_select %p57, %s58, %s59
      %p63 = pneg %p57
      %p64 = scmp.eq.s32.totalorder %s34, 1
      %p65 = por %p63, %p64
      %p66 = scmp.ne.s32.totalorder %s58, %s61
      %p67 = scmp.eq.s32.totalorder %s34, 0
      %p68 = por %p66, %p67
      %p69 = scmp.ne.s32.totalorder %s58, %s61
      %p70 = scmp.eq.s32.totalorder %s39, 1
      %p71 = por %p69, %p70
      %p72 = scmp.ne.s32.totalorder %s61, %s62
      %p73 = scmp.eq.s32.totalorder %s39, 0
      %p74 = por %p72, %p73
      %p75 = scmp.ne.s32.totalorder %s61, %s62
      %p76 = scmp.eq.s32.totalorder %s40, 1
      %p77 = por %p75, %p76
      %p79 = scmp.ne.s32.totalorder %s62, %s78
      %p80 = scmp.eq.s32.totalorder %s40, 0
      %p81 = por %p79, %p80
      %s83 = sadd.s32 %s82, 1
      %p86 = scmp.eq.s32.totalorder %s34, 1
      %p87 = scmp.ne.s32.totalorder %s82, %s84
      %p88 = scmp.eq.s32.totalorder %s34, 0
      %p89 = por %p87, %p88
      %p90 = scmp.ne.s32.totalorder %s82, %s84
      %p91 = scmp.eq.s32.totalorder %s39, 1
      %p92 = por %p90, %p91
      %p93 = scmp.ne.s32.totalorder %s84, %s85
      %p94 = scmp.eq.s32.totalorder %s39, 0
      %p95 = por %p93, %p94
      %p96 = scmp.ne.s32.totalorder %s84, %s85
      %p97 = scmp.eq.s32.totalorder %s40, 1
      %p98 = por %p96, %p97
      %p100 = scmp.ne.s32.totalorder %s85, %s99
      %p101 = scmp.eq.s32.totalorder %s40, 0
      %p102 = por %p100, %p101
      %s104 = sadd.s32 %s103, 1
      %p107 = scmp.eq.s32.totalorder %s34, 1
      %p108 = scmp.ne.s32.totalorder %s103, %s105
      %p109 = scmp.eq.s32.totalorder %s34, 0
      %p110 = por %p108, %p109
      %p111 = scmp.ne.s32.totalorder %s103, %s105
      %p112 = scmp.eq.s32.totalorder %s39, 1
      %p113 = por %p111, %p112
      %p114 = scmp.ne.s32.totalorder %s105, %s106
      %p115 = scmp.eq.s32.totalorder %s39, 0
      %p116 = por %p114, %p115
      %p117 = scmp.ne.s32.totalorder %s105, %s106
      %p118 = scmp.eq.s32.totalorder %s40, 1
      %p119 = por %p117, %p118
      %p121 = scmp.ne.s32.totalorder %s106, %s120
      %p122 = scmp.eq.s32.totalorder %s40, 0
      %p123 = por %p121, %p122
      %s125 = sadd.s32 %s124, 1
      %p128 = scmp.eq.s32.totalorder %s34, 1
      %p129 = scmp.ne.s32.totalorder %s124, %s126
      %p130 = scmp.eq.s32.totalorder %s34, 0
      %p131 = por %p129, %p130
      %p132 = scmp.ne.s32.totalorder %s124, %s126
      %p133 = scmp.eq.s32.totalorder %s39, 1
      %p134 = por %p132, %p133
      %p135 = scmp.ne.s32.totalorder %s126, %s127
      %p136 = scmp.eq.s32.totalorder %s39, 0
      %p137 = por %p135, %p136
      %p138 = scmp.ne.s32.totalorder %s126, %s127
      %p139 = scmp.eq.s32.totalorder %s40, 1
      %p140 = por %p138, %p139
      %p142 = scmp.ne.s32.totalorder %s127, %s141
      %p143 = scmp.eq.s32.totalorder %s40, 0
      %p144 = por %p142, %p143
      %s146 = sadd.s32 %s145, 1
      %p149 = scmp.eq.s32.totalorder %s34, 1
      %p150 = scmp.ne.s32.totalorder %s145, %s147
      %p151 = scmp.eq.s32.totalorder %s34, 0
      %p152 = por %p150, %p151
      %p153 = scmp.ne.s32.totalorder %s145, %s147
      %p154 = scmp.eq.s32.totalorder %s39, 1
      %p155 = por %p153, %p154
      %p156 = scmp.ne.s32.totalorder %s147, %s148
      %p157 = scmp.eq.s32.totalorder %s39, 0
      %p158 = por %p156, %p157
      %p159 = scmp.ne.s32.totalorder %s147, %s148
      %p160 = scmp.eq.s32.totalorder %s40, 1
      %p161 = por %p159, %p160
      %p163 = scmp.ne.s32.totalorder %s148, %s162
      %p164 = scmp.eq.s32.totalorder %s40, 0
      %p165 = por %p163, %p164
      %s167 = sadd.s32 %s166, 1
      %p170 = scmp.eq.s32.totalorder %s34, 1
      %p171 = scmp.ne.s32.totalorder %s166, %s168
      %p172 = scmp.eq.s32.totalorder %s34, 0
      %p173 = por %p171, %p172
      %p174 = scmp.ne.s32.totalorder %s166, %s168
      %p175 = scmp.eq.s32.totalorder %s39, 1
      %p176 = por %p174, %p175
      %p177 = scmp.ne.s32.totalorder %s168, %s169
      %p178 = scmp.eq.s32.totalorder %s39, 0
      %p179 = por %p177, %p178
      %p180 = scmp.ne.s32.totalorder %s168, %s169
      %p181 = scmp.eq.s32.totalorder %s40, 1
      %p182 = por %p180, %p181
      %p184 = scmp.ne.s32.totalorder %s169, %s183
      %p185 = scmp.eq.s32.totalorder %s40, 0
      %p186 = por %p184, %p185
      %s188 = sadd.s32 %s187, 1
      %p191 = scmp.eq.s32.totalorder %s34, 1
      %p192 = scmp.ne.s32.totalorder %s187, %s189
      %p193 = scmp.eq.s32.totalorder %s34, 0
      %p194 = por %p192, %p193
      %p195 = scmp.ne.s32.totalorder %s187, %s189
      %p196 = scmp.eq.s32.totalorder %s39, 1
      %p197 = por %p195, %p196
      %p198 = scmp.ne.s32.totalorder %s189, %s190
      %p199 = scmp.eq.s32.totalorder %s39, 0
      %p200 = por %p198, %p199
      %p201 = scmp.ne.s32.totalorder %s189, %s190
      %p202 = scmp.eq.s32.totalorder %s40, 1
      %p203 = por %p201, %p202
      %p205 = scmp.ne.s32.totalorder %s190, %s204
      %p206 = scmp.eq.s32.totalorder %s40, 0
      %p207 = por %p205, %p206
      %s209 = sadd.s32 %s208, 1
      %p212 = scmp.eq.s32.totalorder %s34, 1
      %p213 = scmp.ne.s32.totalorder %s208, %s210
      %p214 = scmp.eq.s32.totalorder %s34, 0
      %p215 = por %p213, %p214
      %p216 = scmp.ne.s32.totalorder %s208, %s210
      %p217 = scmp.eq.s32.totalorder %s39, 1
      %p218 = por %p216, %p217
      %p219 = scmp.ne.s32.totalorder %s210, %s211
      %p220 = scmp.eq.s32.totalorder %s39, 0
      %p221 = por %p219, %p220
      %p222 = scmp.ne.s32.totalorder %s210, %s211
      %p223 = scmp.eq.s32.totalorder %s40, 1
      %p224 = por %p222, %p223
      %p226 = scmp.ne.s32.totalorder %s211, %s225
      %p227 = scmp.eq.s32.totalorder %s40, 0
      %p228 = por %p226, %p227
      %s230 = sadd.s32 %s229, 1
      %p233 = scmp.eq.s32.totalorder %s34, 1
      %p234 = scmp.ne.s32.totalorder %s229, %s231
      %p235 = scmp.eq.s32.totalorder %s34, 0
      %p236 = por %p234, %p235
      %p237 = scmp.ne.s32.totalorder %s229, %s231
      %p238 = scmp.eq.s32.totalorder %s39, 1
      %p239 = por %p237, %p238
      %p240 = scmp.ne.s32.totalorder %s231, %s232
      %p241 = scmp.eq.s32.totalorder %s39, 0
      %p242 = por %p240, %p241
      %p243 = scmp.ne.s32.totalorder %s231, %s232
      %p244 = scmp.eq.s32.totalorder %s40, 1
      %p245 = por %p243, %p244
      %p247 = scmp.ne.s32.totalorder %s232, %s246
      %p248 = scmp.eq.s32.totalorder %s40, 0
      %p249 = por %p247, %p248
      %s251 = sadd.s32 %s250, 1
      %p254 = scmp.eq.s32.totalorder %s34, 1
      %p255 = scmp.ne.s32.totalorder %s250, %s252
      %p256 = scmp.eq.s32.totalorder %s34, 0
      %p257 = por %p255, %p256
      %p258 = scmp.ne.s32.totalorder %s250, %s252
      %p259 = scmp.eq.s32.totalorder %s39, 1
      %p260 = por %p258, %p259
      %p261 = scmp.ne.s32.totalorder %s252, %s253
      %p262 = scmp.eq.s32.totalorder %s39, 0
      %p263 = por %p261, %p262
      %p264 = scmp.ne.s32.totalorder %s252, %s253
      %p265 = scmp.eq.s32.totalorder %s40, 1
      %p266 = por %p264, %p265
      %p268 = scmp.ne.s32.totalorder %s253, %s267
      %p269 = scmp.eq.s32.totalorder %s40, 0
      %p270 = por %p268, %p269
      %s272 = sadd.s32 %s271, 1
      %p275 = scmp.eq.s32.totalorder %s34, 1
      %p276 = scmp.ne.s32.totalorder %s271, %s273
      %p277 = scmp.eq.s32.totalorder %s34, 0
      %p278 = por %p276, %p277
      %p279 = scmp.ne.s32.totalorder %s271, %s273
      %p280 = scmp.eq.s32.totalorder %s39, 1
      %p281 = por %p279, %p280
      %p282 = scmp.ne.s32.totalorder %s273, %s274
      %p283 = scmp.eq.s32.totalorder %s39, 0
      %p284 = por %p282, %p283
      %p285 = scmp.ne.s32.totalorder %s273, %s274
      %p286 = scmp.eq.s32.totalorder %s40, 1
      %p287 = por %p285, %p286
      %p289 = scmp.ne.s32.totalorder %s274, %s288
      %p290 = scmp.eq.s32.totalorder %s40, 0
      %p291 = por %p289, %p290
      %s293 = sadd.s32 %s292, 1
      %p296 = scmp.eq.s32.totalorder %s34, 1
      %p297 = scmp.ne.s32.totalorder %s292, %s294
      %p298 = scmp.eq.s32.totalorder %s34, 0
      %p299 = por %p297, %p298
      %p300 = scmp.ne.s32.totalorder %s292, %s294
      %p301 = scmp.eq.s32.totalorder %s39, 1
      %p302 = por %p300, %p301
      %p303 = scmp.ne.s32.totalorder %s294, %s295
      %p304 = scmp.eq.s32.totalorder %s39, 0
      %p305 = por %p303, %p304
      %p306 = scmp.ne.s32.totalorder %s294, %s295
      %p307 = scmp.eq.s32.totalorder %s40, 1
      %p308 = por %p306, %p307
      %p310 = scmp.ne.s32.totalorder %s295, %s309
      %p311 = scmp.eq.s32.totalorder %s40, 0
      %p312 = por %p310, %p311
      %s314 = sadd.s32 %s313, 1
      %p317 = scmp.eq.s32.totalorder %s34, 1
      %p318 = scmp.ne.s32.totalorder %s313, %s315
      %p319 = scmp.eq.s32.totalorder %s34, 0
      %p320 = por %p318, %p319
      %p321 = scmp.ne.s32.totalorder %s313, %s315
      %p322 = scmp.eq.s32.totalorder %s39, 1
      %p323 = por %p321, %p322
      %p324 = scmp.ne.s32.totalorder %s315, %s316
      %p325 = scmp.eq.s32.totalorder %s39, 0
      %p326 = por %p324, %p325
      %p327 = scmp.ne.s32.totalorder %s315, %s316
      %p328 = scmp.eq.s32.totalorder %s40, 1
      %p329 = por %p327, %p328
      %p331 = scmp.ne.s32.totalorder %s316, %s330
      %p332 = scmp.eq.s32.totalorder %s40, 0
      %p333 = por %p331, %p332
      %s334 = ssub.s32 %s41, %s53
      %p335 = scmp.eq.s32.totalorder %s334, 0
      %s337 = sadd.s32 %s336, 1
      %s338 = scalar_select %p335, %s336, %s337
      %p341 = pneg %p335
      %p342 = scmp.eq.s32.totalorder %s34, 1
      %p343 = por %p341, %p342
      %p344 = scmp.ne.s32.totalorder %s336, %s339
      %p345 = scmp.eq.s32.totalorder %s34, 0
      %p346 = por %p344, %p345
      %p347 = scmp.ne.s32.totalorder %s336, %s339
      %p348 = scmp.eq.s32.totalorder %s39, 1
      %p349 = por %p347, %p348
      %p350 = scmp.ne.s32.totalorder %s339, %s340
      %p351 = scmp.eq.s32.totalorder %s39, 0
      %p352 = por %p350, %p351
      %p353 = scmp.ne.s32.totalorder %s339, %s340
      %p354 = scmp.eq.s32.totalorder %s40, 1
      %p355 = por %p353, %p354
      %p357 = scmp.ne.s32.totalorder %s340, %s356
      %p358 = scmp.eq.s32.totalorder %s40, 0
      %p359 = por %p357, %p358
      %s360 = ssub.s32 %s41, %s53
      %p361 = scmp.eq.s32.totalorder %s360, 0
      %s363 = sadd.s32 %s362, 1
      %s364 = scalar_select %p361, %s362, %s363
      %p367 = pneg %p361
      %p368 = scmp.eq.s32.totalorder %s34, 1
      %p369 = por %p367, %p368
      %p370 = scmp.ne.s32.totalorder %s362, %s365
      %p371 = scmp.eq.s32.totalorder %s34, 0
      %p372 = por %p370, %p371
      %p373 = scmp.ne.s32.totalorder %s362, %s365
      %p374 = scmp.eq.s32.totalorder %s39, 1
      %p375 = por %p373, %p374
      %p376 = scmp.ne.s32.totalorder %s365, %s366
      %p377 = scmp.eq.s32.totalorder %s39, 0
      %p378 = por %p376, %p377
      %p379 = scmp.ne.s32.totalorder %s365, %s366
      %p380 = scmp.eq.s32.totalorder %s40, 1
      %p381 = por %p379, %p380
      %p383 = scmp.ne.s32.totalorder %s366, %s382
      %p384 = scmp.eq.s32.totalorder %s40, 0
      %p385 = por %p383, %p384
      %s386 = ssub.s32 %s41, %s53
      %p387 = scmp.eq.s32.totalorder %s386, 0
      %s389 = sadd.s32 %s388, 1
      %s390 = scalar_select %p387, %s388, %s389
      %p393 = pneg %p387
      %p394 = scmp.eq.s32.totalorder %s34, 1
      %p395 = por %p393, %p394
      %p396 = scmp.ne.s32.totalorder %s388, %s391
      %p397 = scmp.eq.s32.totalorder %s34, 0
      %p398 = por %p396, %p397
      %p399 = scmp.ne.s32.totalorder %s388, %s391
      %p400 = scmp.eq.s32.totalorder %s39, 1
      %p401 = por %p399, %p400
      %p402 = scmp.ne.s32.totalorder %s391, %s392
      %p403 = scmp.eq.s32.totalorder %s39, 0
      %p404 = por %p402, %p403
      %p405 = scmp.ne.s32.totalorder %s391, %s392
      %p406 = scmp.eq.s32.totalorder %s40, 1
      %p407 = por %p405, %p406
      %p409 = scmp.ne.s32.totalorder %s392, %s408
      %p410 = scmp.eq.s32.totalorder %s40, 0
      %p411 = por %p409, %p410
      %p412 = scmp.le.s32.totalorder 1, %s34
      %p413 = scmp.lt.s32.totalorder %s34, 3
      %p414 = pnand %p412, %p413
      %p415 = pneg %p414
      // Predicated region
      $region9: #{tpu_custom_call.1} parent=5 // pred_check
        _
      $region10: #{tpu_custom_call.1} parent=5 // pred_check_branch
        %417 = sbr.rel (%p414) target = $region12
      $region11: #{tpu_custom_call.1} parent=5 // pred_region
        %s418 = ssub.s32 %s34, 1
        // Predicated region
        $region13: #{tpu_custom_call.1} parent=11 // pred_check
          %p419 = pneg %p95
        $region14: #{tpu_custom_call.1} parent=11 // pred_check_branch
          %421 = sbr.rel (%p419) target = $region16
        $region15: #{tpu_custom_call.1} parent=11 // pred_region
          %s423 = ssub.s32 2048, 2048
          %424 = vsyncadd [#allocation9], %s423
          %s425 = sshll.u32 [#allocation8], 4
          %s426 = int_to_ptr.vmem [resolvable:$true] %s425
          %431 = dma.hbm_to_vmem [thread:$0]  %s1, 2048, %s426, [#allocation9], 128, 128, 8
        $region16: #{tpu_custom_call.1} parent=11 // pred_fallthru
          _
        // Predicated region
        $region17: #{tpu_custom_call.1} parent=11 // pred_check
          %p432 = pneg %p116
        $region18: #{tpu_custom_call.1} parent=11 // pred_check_branch
          %434 = sbr.rel (%p432) target = $region20
        $region19: #{tpu_custom_call.1} parent=11 // pred_region
          _
        $region20: #{tpu_custom_call.1} parent=11 // pred_fallthru
          _
        // Predicated region
        $region21: #{tpu_custom_call.1} parent=11 // pred_check
          %p435 = pneg %p137
        $region22: #{tpu_custom_call.1} parent=11 // pred_check_branch
          %437 = sbr.rel (%p435) target = $region24
        $region23: #{tpu_custom_call.1} parent=11 // pred_region
          %s439 = ssub.s32 2048, 2048
          %440 = vsyncadd [#allocation9], %s439
          %s441 = sshll.u32 [#allocation10], 4
          %s442 = int_to_ptr.vmem [resolvable:$true] %s441
          %447 = dma.hbm_to_vmem [thread:$0]  %s3, 2048, %s442, [#allocation9], 128, 128, 8
        $region24: #{tpu_custom_call.1} parent=11 // pred_fallthru
          _
        // Predicated region
        $region25: #{tpu_custom_call.1} parent=11 // pred_check
          %p448 = pneg %p158
        $region26: #{tpu_custom_call.1} parent=11 // pred_check_branch
          %450 = sbr.rel (%p448) target = $region28
        $region27: #{tpu_custom_call.1} parent=11 // pred_region
          _
        $region28: #{tpu_custom_call.1} parent=11 // pred_fallthru
          _
        // Predicated region
        $region29: #{tpu_custom_call.1} parent=11 // pred_check
          %p451 = pneg %p179
        $region30: #{tpu_custom_call.1} parent=11 // pred_check_branch
          %453 = sbr.rel (%p451) target = $region32
        $region31: #{tpu_custom_call.1} parent=11 // pred_region
          %s455 = ssub.s32 2048, 2048
          %456 = vsyncadd [#allocation12], %s455
          %s457 = sshll.u32 [#allocation11], 4
          %s458 = int_to_ptr.vmem [resolvable:$true] %s457
          %463 = dma.hbm_to_vmem [thread:$0]  %s5, 2048, %s458, [#allocation12], 128, 128, 8
        $region32: #{tpu_custom_call.1} parent=11 // pred_fallthru
          _
        // Predicated region
        $region33: #{tpu_custom_call.1} parent=11 // pred_check
          %p464 = pneg %p200
        $region34: #{tpu_custom_call.1} parent=11 // pred_check_branch
          %466 = sbr.rel (%p464) target = $region36
        $region35: #{tpu_custom_call.1} parent=11 // pred_region
          _
        $region36: #{tpu_custom_call.1} parent=11 // pred_fallthru
          _
        // Predicated region
        $region37: #{tpu_custom_call.1} parent=11 // pred_check
          %p467 = pneg %p221
        $region38: #{tpu_custom_call.1} parent=11 // pred_check_branch
          %469 = sbr.rel (%p467) target = $region40
        $region39: #{tpu_custom_call.1} parent=11 // pred_region
          %s471 = ssub.s32 6144, 6144
          %472 = vsyncadd [#allocation12], %s471
          %s473 = sshll.u32 [#allocation13], 4
          %s474 = int_to_ptr.vmem [resolvable:$true] %s473
          %479 = dma.hbm_to_vmem [thread:$0]  %s7, 6144, %s474, [#allocation12], 384, 384, 24
        $region40: #{tpu_custom_call.1} parent=11 // pred_fallthru
          _
        // Predicated region
        $region41: #{tpu_custom_call.1} parent=11 // pred_check
          %p480 = pneg %p242
        $region42: #{tpu_custom_call.1} parent=11 // pred_check_branch
          %482 = sbr.rel (%p480) target = $region44
        $region43: #{tpu_custom_call.1} parent=11 // pred_region
          _
        $region44: #{tpu_custom_call.1} parent=11 // pred_fallthru
          _
        // Predicated region
        $region45: #{tpu_custom_call.1} parent=11 // pred_check
          %p483 = pneg %p263
        $region46: #{tpu_custom_call.1} parent=11 // pred_check_branch
          %485 = sbr.rel (%p483) target = $region48
        $region47: #{tpu_custom_call.1} parent=11 // pred_region
          %s487 = ssub.s32 6144, 6144
          %488 = vsyncadd [#allocation15], %s487
          %s489 = sshll.u32 [#allocation14], 4
          %s490 = int_to_ptr.vmem [resolvable:$true] %s489
          %495 = dma.hbm_to_vmem [thread:$0]  %s9, 6144, %s490, [#allocation15], 384, 384, 24
        $region48: #{tpu_custom_call.1} parent=11 // pred_fallthru
          _
        // Predicated region
        $region49: #{tpu_custom_call.1} parent=11 // pred_check
          %p496 = pneg %p284
        $region50: #{tpu_custom_call.1} parent=11 // pred_check_branch
          %498 = sbr.rel (%p496) target = $region52
        $region51: #{tpu_custom_call.1} parent=11 // pred_region
          _
        $region52: #{tpu_custom_call.1} parent=11 // pred_fallthru
          _
        // Predicated region
        $region53: #{tpu_custom_call.1} parent=11 // pred_check
          %p499 = pneg %p305
        $region54: #{tpu_custom_call.1} parent=11 // pred_check_branch
          %501 = sbr.rel (%p499) target = $region56
        $region55: #{tpu_custom_call.1} parent=11 // pred_region
          %s503 = ssub.s32 6144, 6144
          %504 = vsyncadd [#allocation15], %s503
          %s505 = sshll.u32 [#allocation16], 4
          %s506 = int_to_ptr.vmem [resolvable:$true] %s505
          %511 = dma.hbm_to_vmem [thread:$0]  %s11, 6144, %s506, [#allocation15], 384, 384, 24
        $region56: #{tpu_custom_call.1} parent=11 // pred_fallthru
          _
        // Predicated region
        $region57: #{tpu_custom_call.1} parent=11 // pred_check
          %p512 = pneg %p326
        $region58: #{tpu_custom_call.1} parent=11 // pred_check_branch
          %514 = sbr.rel (%p512) target = $region60
        $region59: #{tpu_custom_call.1} parent=11 // pred_region
          _
        $region60: #{tpu_custom_call.1} parent=11 // pred_fallthru
          _
      $region12: #{tpu_custom_call.1} parent=5 // pred_fallthru
        _
      %p515 = scmp.lt.s32.totalorder %s34, 2
      // Predicated region
      $region61: #{tpu_custom_call.1} parent=5 // pred_check
        %p516 = pneg %p515
      $region62: #{tpu_custom_call.1} parent=5 // pred_check_branch
        %518 = sbr.rel (%p516) target = $region64
      $region63: #{tpu_custom_call.1} parent=5 // pred_region
        // Predicated region
        $region65: #{tpu_custom_call.1} parent=63 // pred_check
          %p519 = pneg %p68
        $region66: #{tpu_custom_call.1} parent=63 // pred_check_branch
          %521 = sbr.rel (%p519) target = $region68
        $region67: #{tpu_custom_call.1} parent=63 // pred_region
          %s522 = sand.u32 %s58, 1
          %s523 = scalar_lea.sflag [#allocation6], %s522
          %s524 = sand.u32 %s58, 1
          %s525 = smul.addr %s524, 256
          %s526 = scalar_lea.vmem [#allocation5], %s525
          %s527 = smul.u32 32, %s42
          %s529 = ssub.s32 4096, 4096
          %530 = vsyncadd %s523, %s529
          %s531 = smul.addr %s41, 32
          %s532 = sadd.s32 %s527, %s531
          %s533 = smul.addr %s532, 128
          %s534 = scalar_lea.hbm %s0, %s533
          %s535 = sshll.u32 %s526, 4
          %s536 = int_to_ptr.vmem [resolvable:$true] %s535
          %541 = dma.hbm_to_vmem [thread:$0]  %s534, 4096, %s536, %s523, 128, 128, 8
        $region68: #{tpu_custom_call.1} parent=63 // pred_fallthru
          _
      $region64: #{tpu_custom_call.1} parent=5 // pred_fallthru
        _
      %p542 = scmp.le.s32.totalorder 1, %s34
      %p543 = scmp.lt.s32.totalorder %s34, 3
      %p544 = pnand %p542, %p543
      %p545 = pneg %p544
      // Predicated region
      $region69: #{tpu_custom_call.1} parent=5 // pred_check
        _
      $region70: #{tpu_custom_call.1} parent=5 // pred_check_branch
        %547 = sbr.rel (%p544) target = $region72
      $region71: #{tpu_custom_call.1} parent=5 // pred_region
        %s548 = ssub.s32 %s34, 1
        %s549 = sand.u32 %s61, 1
        %s550 = scalar_lea.sflag [#allocation6], %s549
        %s551 = sand.u32 %s61, 1
        %s552 = smul.addr %s551, 256
        %s553 = scalar_lea.vmem [#allocation5], %s552
        // Predicated region
        $region73: #{tpu_custom_call.1} parent=71 // pred_check
          %p554 = pneg %p74
        $region74: #{tpu_custom_call.1} parent=71 // pred_check_branch
          %556 = sbr.rel (%p554) target = $region76
        $region75: #{tpu_custom_call.1} parent=71 // pred_region
          %557 = dma.done %s550, 4096
        $region76: #{tpu_custom_call.1} parent=71 // pred_fallthru
          _
        // Predicated region
        $region77: #{tpu_custom_call.1} parent=71 // pred_check
          %p558 = pneg %p95
        $region78: #{tpu_custom_call.1} parent=71 // pred_check_branch
          %560 = sbr.rel (%p558) target = $region80
        $region79: #{tpu_custom_call.1} parent=71 // pred_region
          %561 = dma.done [#allocation9], 2048
        $region80: #{tpu_custom_call.1} parent=71 // pred_fallthru
          _
        // Predicated region
        $region81: #{tpu_custom_call.1} parent=71 // pred_check
          %p562 = pneg %p137
        $region82: #{tpu_custom_call.1} parent=71 // pred_check_branch
          %564 = sbr.rel (%p562) target = $region84
        $region83: #{tpu_custom_call.1} parent=71 // pred_region
          %565 = dma.done [#allocation9], 2048
        $region84: #{tpu_custom_call.1} parent=71 // pred_fallthru
          _
        // Predicated region
        $region85: #{tpu_custom_call.1} parent=71 // pred_check
          %p566 = pneg %p179
        $region86: #{tpu_custom_call.1} parent=71 // pred_check_branch
          %568 = sbr.rel (%p566) target = $region88
        $region87: #{tpu_custom_call.1} parent=71 // pred_region
          %569 = dma.done [#allocation12], 2048
        $region88: #{tpu_custom_call.1} parent=71 // pred_fallthru
          _
        // Predicated region
        $region89: #{tpu_custom_call.1} parent=71 // pred_check
          %p570 = pneg %p221
        $region90: #{tpu_custom_call.1} parent=71 // pred_check_branch
          %572 = sbr.rel (%p570) target = $region92
        $region91: #{tpu_custom_call.1} parent=71 // pred_region
          %573 = dma.done [#allocation12], 6144
        $region92: #{tpu_custom_call.1} parent=71 // pred_fallthru
          _
        // Predicated region
        $region93: #{tpu_custom_call.1} parent=71 // pred_check
          %p574 = pneg %p263
        $region94: #{tpu_custom_call.1} parent=71 // pred_check_branch
          %576 = sbr.rel (%p574) target = $region96
        $region95: #{tpu_custom_call.1} parent=71 // pred_region
          %577 = dma.done [#allocation15], 6144
        $region96: #{tpu_custom_call.1} parent=71 // pred_fallthru
          _
        // Predicated region
        $region97: #{tpu_custom_call.1} parent=71 // pred_check
          %p578 = pneg %p305
        $region98: #{tpu_custom_call.1} parent=71 // pred_check_branch
          %580 = sbr.rel (%p578) target = $region100
        $region99: #{tpu_custom_call.1} parent=71 // pred_region
          %581 = dma.done [#allocation15], 6144
        $region100: #{tpu_custom_call.1} parent=71 // pred_fallthru
          _
        %s582 = sand.u32 %s61, 1
        %s583 = scalar_lea.sflag [#allocation6], %s582
        %s584 = sand.u32 %s61, 1
        %s585 = smul.addr %s584, 256
        %s586 = scalar_lea.vmem [#allocation5], %s585
        %p587 = pneg %p74
        %p588 = pneg %p71
        %p589 = pneg %p95
        %p590 = pneg %p92
        %p591 = pneg %p116
        %p592 = pneg %p113
        %p593 = pneg %p137
        %p594 = pneg %p134
        %p595 = pneg %p158
        %p596 = pneg %p155
        %p597 = pneg %p179
        %p598 = pneg %p176
        %p599 = pneg %p200
        %p600 = pneg %p197
        %p601 = pneg %p221
        %p602 = pneg %p218
        %p603 = pneg %p242
        %p604 = pneg %p239
        %p605 = pneg %p263
        %p606 = pneg %p260
        %p607 = pneg %p284
        %p608 = pneg %p281
        %p609 = pneg %p305
        %p610 = pneg %p302
        %p611 = pneg %p326
        %p612 = pneg %p323
        %p613 = pneg %p352
        %p614 = pneg %p349
        %s615 = sand.u32 %s339, 1
        %s616 = scalar_lea.sflag [#allocation7], %s615
        %s617 = sand.u32 %s339, 1
        %s618 = scalar_lea.vmem [#allocation17], %s617
        %p619 = pneg %p378
        %p620 = pneg %p375
        %s621 = sand.u32 %s39, 1
        %s622 = scalar_lea.sflag [#allocation19], %s621
        %s623 = sand.u32 %s365, 1
        %s624 = scalar_lea.vmem [#allocation18], %s623
        %p625 = pneg %p404
        %p626 = pneg %p401
        %s627 = sand.u32 %s39, 1
        %s628 = scalar_lea.sflag [#allocation19], %s627
        %s629 = sand.u32 %s391, 1
        %s630 = scalar_lea.vmem [#allocation20], %s629
        %s631 = smul.u32 32, %s44
        %p632 = scmp.eq.s32.totalorder %s44, 0
        // Predicated region
        $region101: #{tpu_custom_call.1} parent=71 // pred_check
          %p633 = pneg %p632
        $region102: #{tpu_custom_call.1} parent=71 // pred_check_branch
          %635 = sbr.rel (%p633) target = $region104
        $region103: #{tpu_custom_call.1} parent=71 // pred_region
          %636 = vst [vmem:[#allocation2] sm:$0x1] 0.0
          %637 = vst [vmem:[#allocation3] sm:$0x1] 0.0
          %638 = vst [vmem:[#allocation4] sm:$0x1] 0.0
        $region104: #{tpu_custom_call.1} parent=71 // pred_fallthru
          _
        %v639 = vld [vmem:[%s553] sm:$0xff]
        %v640 = vld [vmem:[%s553 + $0x8] sm:$0xff]
        %v641 = vld [vmem:[%s553 + $0x10] sm:$0xff]
        %v642 = vld [vmem:[%s553 + $0x18] sm:$0xff]
        %v643 = vld [vmem:[%s553 + $0x20] sm:$0xff]
        %v644 = vld [vmem:[%s553 + $0x28] sm:$0xff]
        %v645 = vld [vmem:[%s553 + $0x30] sm:$0xff]
        %v646 = vld [vmem:[%s553 + $0x38] sm:$0xff]
        %v647 = vld [vmem:[%s553 + $0x40] sm:$0xff]
        %v648 = vld [vmem:[%s553 + $0x48] sm:$0xff]
        %v649 = vld [vmem:[%s553 + $0x50] sm:$0xff]
        %v650 = vld [vmem:[%s553 + $0x58] sm:$0xff]
        %v651 = vld [vmem:[%s553 + $0x60] sm:$0xff]
        %v652 = vld [vmem:[%s553 + $0x68] sm:$0xff]
        %v653 = vld [vmem:[%s553 + $0x70] sm:$0xff]
        %v654 = vld [vmem:[%s553 + $0x78] sm:$0xff]
        %v655 = vld [vmem:[%s553 + $0x80] sm:$0xff]
        %v656 = vld [vmem:[%s553 + $0x88] sm:$0xff]
        %v657 = vld [vmem:[%s553 + $0x90] sm:$0xff]
        %v658 = vld [vmem:[%s553 + $0x98] sm:$0xff]
        %v659 = vld [vmem:[%s553 + $0xa0] sm:$0xff]
        %v660 = vld [vmem:[%s553 + $0xa8] sm:$0xff]
        %v661 = vld [vmem:[%s553 + $0xb0] sm:$0xff]
        %v662 = vld [vmem:[%s553 + $0xb8] sm:$0xff]
        %v663 = vld [vmem:[%s553 + $0xc0] sm:$0xff]
        %v664 = vld [vmem:[%s553 + $0xc8] sm:$0xff]
        %v665 = vld [vmem:[%s553 + $0xd0] sm:$0xff]
        %v666 = vld [vmem:[%s553 + $0xd8] sm:$0xff]
        %v667 = vld [vmem:[%s553 + $0xe0] sm:$0xff]
        %v668 = vld [vmem:[%s553 + $0xe8] sm:$0xff]
        %v669 = vld [vmem:[%s553 + $0xf0] sm:$0xff]
        %v670 = vld [vmem:[%s553 + $0xf8] sm:$0xff]
        %v671 = vld [vmem:[#allocation8] sm:$0xff]
        %v672 = vld [vmem:[#allocation8 + $0x8] sm:$0xff]
        %v673 = vld [vmem:[#allocation8 + $0x10] sm:$0xff]
        %v674 = vld [vmem:[#allocation8 + $0x18] sm:$0xff]
        %v675 = vld [vmem:[#allocation8 + $0x20] sm:$0xff]
        %v676 = vld [vmem:[#allocation8 + $0x28] sm:$0xff]
        %v677 = vld [vmem:[#allocation8 + $0x30] sm:$0xff]
        %v678 = vld [vmem:[#allocation8 + $0x38] sm:$0xff]
        %v679 = vld [vmem:[#allocation8 + $0x40] sm:$0xff]
        %v680 = vld [vmem:[#allocation8 + $0x48] sm:$0xff]
        %v681 = vld [vmem:[#allocation8 + $0x50] sm:$0xff]
        %v682 = vld [vmem:[#allocation8 + $0x58] sm:$0xff]
        %v683 = vld [vmem:[#allocation8 + $0x60] sm:$0xff]
        %v684 = vld [vmem:[#allocation8 + $0x68] sm:$0xff]
        %v685 = vld [vmem:[#allocation8 + $0x70] sm:$0xff]
        %v686 = vld [vmem:[#allocation8 + $0x78] sm:$0xff]
        %v687 = vld [vmem:[%s2] sm:$0x1]
        %v689 = vlaneseq
        %v690 = vshrl.u32 %v689, 7
        %v691 = vsub.s32 0, %v690
        %v692 = vrot.slane %v687, %v691
        %694 = vmatprep.subr.mxu0 0.0
        %695 = vmatpush1.msra.mxu0 %v686
        %696 = vmatprep.subr.mxu0 0.0
        %697 = vmatpush1.msra.mxu0 %v685
        %698 = vmatprep.subr.mxu0 0.0
        %699 = vmatpush1.msra.mxu0 %v684
        %700 = vmatprep.subr.mxu0 0.0
        %701 = vmatpush1.msra.mxu0 %v683
        %702 = vmatprep.subr.mxu0 0.0
        %703 = vmatpush1.msra.mxu0 %v682
        %704 = vmatprep.subr.mxu0 0.0
        %705 = vmatpush1.msra.mxu0 %v681
        %706 = vmatprep.subr.mxu0 0.0
        %707 = vmatpush1.msra.mxu0 %v680
        %708 = vmatprep.subr.mxu0 0.0
        %709 = vmatpush1.msra.mxu0 %v679
        %710 = vmatprep.subr.mxu0 0.0
        %711 = vmatpush1.msra.mxu0 %v678
        %712 = vmatprep.subr.mxu0 0.0
        %713 = vmatpush1.msra.mxu0 %v677
        %714 = vmatprep.subr.mxu0 0.0
        %715 = vmatpush1.msra.mxu0 %v676
        %716 = vmatprep.subr.mxu0 0.0
        %717 = vmatpush1.msra.mxu0 %v675
        %718 = vmatprep.subr.mxu0 0.0
        %719 = vmatpush1.msra.mxu0 %v674
        %720 = vmatprep.subr.mxu0 0.0
        %721 = vmatpush1.msra.mxu0 %v673
        %722 = vmatprep.subr.mxu0 0.0
        %723 = vmatpush1.msra.mxu0 %v672
        %724 = vmatprep.subr.mxu0 0.0
        %725 = vmatpush1.msra.mxu0 %v671
        %726 = vmatprep.subr.mxu0 0.0
        %727 = vmatpush2.msra.mxu0 0.0
        %728 = vmatprep.subr.mxu0 0.0
        %729 = vmatpush2.msra.mxu0 0.0
        %730 = vmatprep.subr.mxu0 0.0
        %731 = vmatpush2.msra.mxu0 0.0
        %732 = vmatprep.subr.mxu0 0.0
        %733 = vmatpush2.msra.mxu0 0.0
        %734 = vmatprep.subr.mxu0 0.0
        %735 = vmatpush2.msra.mxu0 0.0
        %736 = vmatprep.subr.mxu0 0.0
        %737 = vmatpush2.msra.mxu0 0.0
        %738 = vmatprep.subr.mxu0 0.0
        %739 = vmatpush2.msra.mxu0 0.0
        %740 = vmatprep.subr.mxu0 0.0
        %741 = vmatpush2.msra.mxu0 0.0
        %742 = vmatprep.subr.mxu0 0.0
        %743 = vmatpush2.msra.mxu0 0.0
        %744 = vmatprep.subr.mxu0 0.0
        %745 = vmatpush2.msra.mxu0 0.0
        %746 = vmatprep.subr.mxu0 0.0
        %747 = vmatpush2.msra.mxu0 0.0
        %748 = vmatprep.subr.mxu0 0.0
        %749 = vmatpush2.msra.mxu0 0.0
        %750 = vmatprep.subr.mxu0 0.0
        %751 = vmatpush2.msra.mxu0 0.0
        %752 = vmatprep.subr.mxu0 0.0
        %753 = vmatpush2.msra.mxu0 0.0
        %754 = vmatprep.subr.mxu0 0.0
        %755 = vmatpush2.msra.mxu0 0.0
        %756 = vmatprep.subr.mxu0 0.0
        %757 = vmatpush2.msra.mxu0 0.0
        %758 = vmatprep.mubr.f32.mxu0 0.0
        %759 = vmatmul.mubr.f32.gmra.mxu0 %v639
        %v760 = vpop.f32.mrf.mxu0
        %v761 = vadd.f32 %v692, %v760
        %v762 = vpop.f32.mrf.mxu0
        %763 = vmatprep.mubr.f32.mxu0 0.0
        %764 = vmatmul.mubr.f32.gmra.mxu0 %v640
        %v765 = vpop.f32.mrf.mxu0
        %v766 = vadd.f32 %v692, %v765
        %v767 = vpop.f32.mrf.mxu0
        %768 = vmatprep.mubr.f32.mxu0 0.0
        %769 = vmatmul.mubr.f32.gmra.mxu0 %v641
        %v770 = vpop.f32.mrf.mxu0
        %v771 = vadd.f32 %v692, %v770
        %v772 = vpop.f32.mrf.mxu0
        %773 = vmatprep.mubr.f32.mxu0 0.0
        %774 = vmatmul.mubr.f32.gmra.mxu0 %v642
        %v775 = vpop.f32.mrf.mxu0
        %v776 = vadd.f32 %v692, %v775
        %v777 = vpop.f32.mrf.mxu0
        %778 = vmatprep.mubr.f32.mxu0 0.0
        %779 = vmatmul.mubr.f32.gmra.mxu0 %v643
        %v780 = vpop.f32.mrf.mxu0
        %v781 = vadd.f32 %v692, %v780
        %v782 = vpop.f32.mrf.mxu0
        %783 = vmatprep.mubr.f32.mxu0 0.0
        %784 = vmatmul.mubr.f32.gmra.mxu0 %v644
        %v785 = vpop.f32.mrf.mxu0
        %v786 = vadd.f32 %v692, %v785
        %v787 = vpop.f32.mrf.mxu0
        %788 = vmatprep.mubr.f32.mxu0 0.0
        %789 = vmatmul.mubr.f32.gmra.mxu0 %v645
        %v790 = vpop.f32.mrf.mxu0
        %v791 = vadd.f32 %v692, %v790
        %v792 = vpop.f32.mrf.mxu0
        %793 = vmatprep.mubr.f32.mxu0 0.0
        %794 = vmatmul.mubr.f32.gmra.mxu0 %v646
        %v795 = vpop.f32.mrf.mxu0
        %v796 = vadd.f32 %v692, %v795
        %v797 = vpop.f32.mrf.mxu0
        %798 = vmatprep.mubr.f32.mxu0 0.0
        %799 = vmatmul.mubr.f32.gmra.mxu0 %v647
        %v800 = vpop.f32.mrf.mxu0
        %v801 = vadd.f32 %v692, %v800
        %v802 = vpop.f32.mrf.mxu0
        %803 = vmatprep.mubr.f32.mxu0 0.0
        %804 = vmatmul.mubr.f32.gmra.mxu0 %v648
        %v805 = vpop.f32.mrf.mxu0
        %v806 = vadd.f32 %v692, %v805
        %v807 = vpop.f32.mrf.mxu0
        %808 = vmatprep.mubr.f32.mxu0 0.0
        %809 = vmatmul.mubr.f32.gmra.mxu0 %v649
        %v810 = vpop.f32.mrf.mxu0
        %v811 = vadd.f32 %v692, %v810
        %v812 = vpop.f32.mrf.mxu0
        %813 = vmatprep.mubr.f32.mxu0 0.0
        %814 = vmatmul.mubr.f32.gmra.mxu0 %v650
        %v815 = vpop.f32.mrf.mxu0
        %v816 = vadd.f32 %v692, %v815
        %v817 = vpop.f32.mrf.mxu0
        %818 = vmatprep.mubr.f32.mxu0 0.0
        %819 = vmatmul.mubr.f32.gmra.mxu0 %v651
        %v820 = vpop.f32.mrf.mxu0
        %v821 = vadd.f32 %v692, %v820
        %v822 = vpop.f32.mrf.mxu0
        %823 = vmatprep.mubr.f32.mxu0 0.0
        %824 = vmatmul.mubr.f32.gmra.mxu0 %v652
        %v825 = vpop.f32.mrf.mxu0
        %v826 = vadd.f32 %v692, %v825
        %v827 = vpop.f32.mrf.mxu0
        %828 = vmatprep.mubr.f32.mxu0 0.0
        %829 = vmatmul.mubr.f32.gmra.mxu0 %v653
        %v830 = vpop.f32.mrf.mxu0
        %v831 = vadd.f32 %v692, %v830
        %v832 = vpop.f32.mrf.mxu0
        %833 = vmatprep.mubr.f32.mxu0 0.0
        %834 = vmatmul.mubr.f32.gmra.mxu0 %v654
        %v835 = vpop.f32.mrf.mxu0
        %v836 = vadd.f32 %v692, %v835
        %v837 = vpop.f32.mrf.mxu0
        %838 = vmatprep.mubr.f32.mxu0 0.0
        %839 = vmatmul.mubr.f32.gmra.mxu0 %v655
        %v840 = vpop.f32.mrf.mxu0
        %v841 = vadd.f32 %v692, %v840
        %v842 = vpop.f32.mrf.mxu0
        %843 = vmatprep.mubr.f32.mxu0 0.0
        %844 = vmatmul.mubr.f32.gmra.mxu0 %v656
        %v845 = vpop.f32.mrf.mxu0
        %v846 = vadd.f32 %v692, %v845
        %v847 = vpop.f32.mrf.mxu0
        %848 = vmatprep.mubr.f32.mxu0 0.0
        %849 = vmatmul.mubr.f32.gmra.mxu0 %v657
        %v850 = vpop.f32.mrf.mxu0
        %v851 = vadd.f32 %v692, %v850
        %v852 = vpop.f32.mrf.mxu0
        %853 = vmatprep.mubr.f32.mxu0 0.0
        %854 = vmatmul.mubr.f32.gmra.mxu0 %v658
        %v855 = vpop.f32.mrf.mxu0
        %v856 = vadd.f32 %v692, %v855
        %v857 = vpop.f32.mrf.mxu0
        %858 = vmatprep.mubr.f32.mxu0 0.0
        %859 = vmatmul.mubr.f32.gmra.mxu0 %v659
        %v860 = vpop.f32.mrf.mxu0
        %v861 = vadd.f32 %v692, %v860
        %v862 = vpop.f32.mrf.mxu0
        %863 = vmatprep.mubr.f32.mxu0 0.0
        %864 = vmatmul.mubr.f32.gmra.mxu0 %v660
        %v865 = vpop.f32.mrf.mxu0
        %v866 = vadd.f32 %v692, %v865
        %v867 = vpop.f32.mrf.mxu0
        %868 = vmatprep.mubr.f32.mxu0 0.0
        %869 = vmatmul.mubr.f32.gmra.mxu0 %v661
        %v870 = vpop.f32.mrf.mxu0
        %v871 = vadd.f32 %v692, %v870
        %v872 = vpop.f32.mrf.mxu0
        %873 = vmatprep.mubr.f32.mxu0 0.0
        %874 = vmatmul.mubr.f32.gmra.mxu0 %v662
        %v875 = vpop.f32.mrf.mxu0
        %v876 = vadd.f32 %v692, %v875
        %v877 = vpop.f32.mrf.mxu0
        %878 = vmatprep.mubr.f32.mxu0 0.0
        %879 = vmatmul.mubr.f32.gmra.mxu0 %v663
        %v880 = vpop.f32.mrf.mxu0
        %v881 = vadd.f32 %v692, %v880
        %v882 = vpop.f32.mrf.mxu0
        %883 = vmatprep.mubr.f32.mxu0 0.0
        %884 = vmatmul.mubr.f32.gmra.mxu0 %v664
        %v885 = vpop.f32.mrf.mxu0
        %v886 = vadd.f32 %v692, %v885
        %v887 = vpop.f32.mrf.mxu0
        %888 = vmatprep.mubr.f32.mxu0 0.0
        %889 = vmatmul.mubr.f32.gmra.mxu0 %v665
        %v890 = vpop.f32.mrf.mxu0
        %v891 = vadd.f32 %v692, %v890
        %v892 = vpop.f32.mrf.mxu0
        %893 = vmatprep.mubr.f32.mxu0 0.0
        %894 = vmatmul.mubr.f32.gmra.mxu0 %v666
        %v895 = vpop.f32.mrf.mxu0
        %v896 = vadd.f32 %v692, %v895
        %v897 = vpop.f32.mrf.mxu0
        %898 = vmatprep.mubr.f32.mxu0 0.0
        %899 = vmatmul.mubr.f32.gmra.mxu0 %v667
        %v900 = vpop.f32.mrf.mxu0
        %v901 = vadd.f32 %v692, %v900
        %v902 = vpop.f32.mrf.mxu0
        %903 = vmatprep.mubr.f32.mxu0 0.0
        %904 = vmatmul.mubr.f32.gmra.mxu0 %v668
        %v905 = vpop.f32.mrf.mxu0
        %v906 = vadd.f32 %v692, %v905
        %v907 = vpop.f32.mrf.mxu0
        %908 = vmatprep.mubr.f32.mxu0 0.0
        %909 = vmatmul.mubr.f32.gmra.mxu0 %v669
        %v910 = vpop.f32.mrf.mxu0
        %v911 = vadd.f32 %v692, %v910
        %v912 = vpop.f32.mrf.mxu0
        %913 = vmatprep.mubr.f32.mxu0 0.0
        %914 = vmatmul.mubr.f32.gmra.mxu0 %v670
        %v915 = vpop.f32.mrf.mxu0
        %v916 = vadd.f32 %v692, %v915
        %v917 = vpop.f32.mrf.mxu0
        %918 = vdwg.mxu0
        %v919 = vmax.f32 %v761, 0.0
        %v920 = vmax.f32 %v766, 0.0
        %v921 = vmax.f32 %v771, 0.0
        %v922 = vmax.f32 %v776, 0.0
        %v923 = vmax.f32 %v781, 0.0
        %v924 = vmax.f32 %v786, 0.0
        %v925 = vmax.f32 %v791, 0.0
        %v926 = vmax.f32 %v796, 0.0
        %v927 = vmax.f32 %v801, 0.0
        %v928 = vmax.f32 %v806, 0.0
        %v929 = vmax.f32 %v811, 0.0
        %v930 = vmax.f32 %v816, 0.0
        %v931 = vmax.f32 %v821, 0.0
        %v932 = vmax.f32 %v826, 0.0
        %v933 = vmax.f32 %v831, 0.0
        %v934 = vmax.f32 %v836, 0.0
        %v935 = vmax.f32 %v841, 0.0
        %v936 = vmax.f32 %v846, 0.0
        %v937 = vmax.f32 %v851, 0.0
        %v938 = vmax.f32 %v856, 0.0
        %v939 = vmax.f32 %v861, 0.0
        %v940 = vmax.f32 %v866, 0.0
        %v941 = vmax.f32 %v871, 0.0
        %v942 = vmax.f32 %v876, 0.0
        %v943 = vmax.f32 %v881, 0.0
        %v944 = vmax.f32 %v886, 0.0
        %v945 = vmax.f32 %v891, 0.0
        %v946 = vmax.f32 %v896, 0.0
        %v947 = vmax.f32 %v901, 0.0
        %v948 = vmax.f32 %v906, 0.0
        %v949 = vmax.f32 %v911, 0.0
        %v950 = vmax.f32 %v916, 0.0
        %v951 = vld [vmem:[#allocation2] sm:$0x1]
        %v952 = vadd.f32 %v919, %v920
        %v953 = vadd.f32 %v952, %v921
        %v954 = vadd.f32 %v953, %v922
        %v955 = vadd.f32 %v954, %v923
        %v956 = vadd.f32 %v955, %v924
        %v957 = vadd.f32 %v956, %v925
        %v958 = vadd.f32 %v957, %v926
        %v959 = vadd.f32 %v958, %v927
        %v960 = vadd.f32 %v959, %v928
        %v961 = vadd.f32 %v960, %v929
        %v962 = vadd.f32 %v961, %v930
        %v963 = vadd.f32 %v962, %v931
        %v964 = vadd.f32 %v963, %v932
        %v965 = vadd.f32 %v964, %v933
        %v966 = vadd.f32 %v965, %v934
        %v967 = vadd.f32 %v966, %v935
        %v968 = vadd.f32 %v967, %v936
        %v969 = vadd.f32 %v968, %v937
        %v970 = vadd.f32 %v969, %v938
        %v971 = vadd.f32 %v970, %v939
        %v972 = vadd.f32 %v971, %v940
        %v973 = vadd.f32 %v972, %v941
        %v974 = vadd.f32 %v973, %v942
        %v975 = vadd.f32 %v974, %v943
        %v976 = vadd.f32 %v975, %v944
        %v977 = vadd.f32 %v976, %v945
        %v978 = vadd.f32 %v977, %v946
        %v979 = vadd.f32 %v978, %v947
        %v980 = vadd.f32 %v979, %v948
        %v981 = vadd.f32 %v980, %v949
        %v982 = vadd.f32 %v981, %v950
        %v983 = vrot.slane %v982, 4
        %v984 = vadd.f32 %v982, %v983
        %v985 = vrot.slane %v984, 2
        %v986 = vadd.f32 %v984, %v985
        %v987 = vrot.slane %v986, 1
        %v988 = vadd.f32 %v986, %v987
        %v989 = vmul.f32 %v988, 0.00390625
        %v990 = vadd.f32 %v951, %v989
        %991 = vst [vmem:[#allocation2] sm:$0x1] %v990
        %v992 = vld [vmem:[#allocation10] sm:$0xff]
        %v993 = vld [vmem:[#allocation10 + $0x8] sm:$0xff]
        %v994 = vld [vmem:[#allocation10 + $0x10] sm:$0xff]
        %v995 = vld [vmem:[#allocation10 + $0x18] sm:$0xff]
        %v996 = vld [vmem:[#allocation10 + $0x20] sm:$0xff]
        %v997 = vld [vmem:[#allocation10 + $0x28] sm:$0xff]
        %v998 = vld [vmem:[#allocation10 + $0x30] sm:$0xff]
        %v999 = vld [vmem:[#allocation10 + $0x38] sm:$0xff]
        %v1000 = vld [vmem:[#allocation10 + $0x40] sm:$0xff]
        %v1001 = vld [vmem:[#allocation10 + $0x48] sm:$0xff]
        %v1002 = vld [vmem:[#allocation10 + $0x50] sm:$0xff]
        %v1003 = vld [vmem:[#allocation10 + $0x58] sm:$0xff]
        %v1004 = vld [vmem:[#allocation10 + $0x60] sm:$0xff]
        %v1005 = vld [vmem:[#allocation10 + $0x68] sm:$0xff]
        %v1006 = vld [vmem:[#allocation10 + $0x70] sm:$0xff]
        %v1007 = vld [vmem:[#allocation10 + $0x78] sm:$0xff]
        %v1008 = vld [vmem:[%s4] sm:$0x1]
        %v1010 = vlaneseq
        %v1011 = vshrl.u32 %v1010, 7
        %v1012 = vsub.s32 0, %v1011
        %v1013 = vrot.slane %v1008, %v1012
        %1015 = vmatprep.subr.mxu0 0.0
        %1016 = vmatpush1.msra.mxu0 %v1007
        %1017 = vmatprep.subr.mxu0 0.0
        %1018 = vmatpush1.msra.mxu0 %v1006
        %1019 = vmatprep.subr.mxu0 0.0
        %1020 = vmatpush1.msra.mxu0 %v1005
        %1021 = vmatprep.subr.mxu0 0.0
        %1022 = vmatpush1.msra.mxu0 %v1004
        %1023 = vmatprep.subr.mxu0 0.0
        %1024 = vmatpush1.msra.mxu0 %v1003
        %1025 = vmatprep.subr.mxu0 0.0
        %1026 = vmatpush1.msra.mxu0 %v1002
        %1027 = vmatprep.subr.mxu0 0.0
        %1028 = vmatpush1.msra.mxu0 %v1001
        %1029 = vmatprep.subr.mxu0 0.0
        %1030 = vmatpush1.msra.mxu0 %v1000
        %1031 = vmatprep.subr.mxu0 0.0
        %1032 = vmatpush1.msra.mxu0 %v999
        %1033 = vmatprep.subr.mxu0 0.0
        %1034 = vmatpush1.msra.mxu0 %v998
        %1035 = vmatprep.subr.mxu0 0.0
        %1036 = vmatpush1.msra.mxu0 %v997
        %1037 = vmatprep.subr.mxu0 0.0
        %1038 = vmatpush1.msra.mxu0 %v996
        %1039 = vmatprep.subr.mxu0 0.0
        %1040 = vmatpush1.msra.mxu0 %v995
        %1041 = vmatprep.subr.mxu0 0.0
        %1042 = vmatpush1.msra.mxu0 %v994
        %1043 = vmatprep.subr.mxu0 0.0
        %1044 = vmatpush1.msra.mxu0 %v993
        %1045 = vmatprep.subr.mxu0 0.0
        %1046 = vmatpush1.msra.mxu0 %v992
        %1047 = vmatprep.subr.mxu0 0.0
        %1048 = vmatpush2.msra.mxu0 0.0
        %1049 = vmatprep.subr.mxu0 0.0
        %1050 = vmatpush2.msra.mxu0 0.0
        %1051 = vmatprep.subr.mxu0 0.0
        %1052 = vmatpush2.msra.mxu0 0.0
        %1053 = vmatprep.subr.mxu0 0.0
        %1054 = vmatpush2.msra.mxu0 0.0
        %1055 = vmatprep.subr.mxu0 0.0
        %1056 = vmatpush2.msra.mxu0 0.0
        %1057 = vmatprep.subr.mxu0 0.0
        %1058 = vmatpush2.msra.mxu0 0.0
        %1059 = vmatprep.subr.mxu0 0.0
        %1060 = vmatpush2.msra.mxu0 0.0
        %1061 = vmatprep.subr.mxu0 0.0
        %1062 = vmatpush2.msra.mxu0 0.0
        %1063 = vmatprep.subr.mxu0 0.0
        %1064 = vmatpush2.msra.mxu0 0.0
        %1065 = vmatprep.subr.mxu0 0.0
        %1066 = vmatpush2.msra.mxu0 0.0
        %1067 = vmatprep.subr.mxu0 0.0
        %1068 = vmatpush2.msra.mxu0 0.0
        %1069 = vmatprep.subr.mxu0 0.0
        %1070 = vmatpush2.msra.mxu0 0.0
        %1071 = vmatprep.subr.mxu0 0.0
        %1072 = vmatpush2.msra.mxu0 0.0
        %1073 = vmatprep.subr.mxu0 0.0
        %1074 = vmatpush2.msra.mxu0 0.0
        %1075 = vmatprep.subr.mxu0 0.0
        %1076 = vmatpush2.msra.mxu0 0.0
        %1077 = vmatprep.subr.mxu0 0.0
        %1078 = vmatpush2.msra.mxu0 0.0
        %1079 = vmatprep.mubr.f32.mxu0 0.0
        %1080 = vmatmul.mubr.f32.gmra.mxu0 %v919
        %v1081 = vpop.f32.mrf.mxu0
        %v1082 = vadd.f32 %v1013, %v1081
        %v1083 = vpop.f32.mrf.mxu0
        %1084 = vmatprep.mubr.f32.mxu0 0.0
        %1085 = vmatmul.mubr.f32.gmra.mxu0 %v920
        %v1086 = vpop.f32.mrf.mxu0
        %v1087 = vadd.f32 %v1013, %v1086
        %v1088 = vpop.f32.mrf.mxu0
        %1089 = vmatprep.mubr.f32.mxu0 0.0
        %1090 = vmatmul.mubr.f32.gmra.mxu0 %v921
        %v1091 = vpop.f32.mrf.mxu0
        %v1092 = vadd.f32 %v1013, %v1091
        %v1093 = vpop.f32.mrf.mxu0
        %1094 = vmatprep.mubr.f32.mxu0 0.0
        %1095 = vmatmul.mubr.f32.gmra.mxu0 %v922
        %v1096 = vpop.f32.mrf.mxu0
        %v1097 = vadd.f32 %v1013, %v1096
        %v1098 = vpop.f32.mrf.mxu0
        %1099 = vmatprep.mubr.f32.mxu0 0.0
        %1100 = vmatmul.mubr.f32.gmra.mxu0 %v923
        %v1101 = vpop.f32.mrf.mxu0
        %v1102 = vadd.f32 %v1013, %v1101
        %v1103 = vpop.f32.mrf.mxu0
        %1104 = vmatprep.mubr.f32.mxu0 0.0
        %1105 = vmatmul.mubr.f32.gmra.mxu0 %v924
        %v1106 = vpop.f32.mrf.mxu0
        %v1107 = vadd.f32 %v1013, %v1106
        %v1108 = vpop.f32.mrf.mxu0
        %1109 = vmatprep.mubr.f32.mxu0 0.0
        %1110 = vmatmul.mubr.f32.gmra.mxu0 %v925
        %v1111 = vpop.f32.mrf.mxu0
        %v1112 = vadd.f32 %v1013, %v1111
        %v1113 = vpop.f32.mrf.mxu0
        %1114 = vmatprep.mubr.f32.mxu0 0.0
        %1115 = vmatmul.mubr.f32.gmra.mxu0 %v926
        %v1116 = vpop.f32.mrf.mxu0
        %v1117 = vadd.f32 %v1013, %v1116
        %v1118 = vpop.f32.mrf.mxu0
        %1119 = vmatprep.mubr.f32.mxu0 0.0
        %1120 = vmatmul.mubr.f32.gmra.mxu0 %v927
        %v1121 = vpop.f32.mrf.mxu0
        %v1122 = vadd.f32 %v1013, %v1121
        %v1123 = vpop.f32.mrf.mxu0
        %1124 = vmatprep.mubr.f32.mxu0 0.0
        %1125 = vmatmul.mubr.f32.gmra.mxu0 %v928
        %v1126 = vpop.f32.mrf.mxu0
        %v1127 = vadd.f32 %v1013, %v1126
        %v1128 = vpop.f32.mrf.mxu0
        %1129 = vmatprep.mubr.f32.mxu0 0.0
        %1130 = vmatmul.mubr.f32.gmra.mxu0 %v929
        %v1131 = vpop.f32.mrf.mxu0
        %v1132 = vadd.f32 %v1013, %v1131
        %v1133 = vpop.f32.mrf.mxu0
        %1134 = vmatprep.mubr.f32.mxu0 0.0
        %1135 = vmatmul.mubr.f32.gmra.mxu0 %v930
        %v1136 = vpop.f32.mrf.mxu0
        %v1137 = vadd.f32 %v1013, %v1136
        %v1138 = vpop.f32.mrf.mxu0
        %1139 = vmatprep.mubr.f32.mxu0 0.0
        %1140 = vmatmul.mubr.f32.gmra.mxu0 %v931
        %v1141 = vpop.f32.mrf.mxu0
        %v1142 = vadd.f32 %v1013, %v1141
        %v1143 = vpop.f32.mrf.mxu0
        %1144 = vmatprep.mubr.f32.mxu0 0.0
        %1145 = vmatmul.mubr.f32.gmra.mxu0 %v932
        %v1146 = vpop.f32.mrf.mxu0
        %v1147 = vadd.f32 %v1013, %v1146
        %v1148 = vpop.f32.mrf.mxu0
        %1149 = vmatprep.mubr.f32.mxu0 0.0
        %1150 = vmatmul.mubr.f32.gmra.mxu0 %v933
        %v1151 = vpop.f32.mrf.mxu0
        %v1152 = vadd.f32 %v1013, %v1151
        %v1153 = vpop.f32.mrf.mxu0
        %1154 = vmatprep.mubr.f32.mxu0 0.0
        %1155 = vmatmul.mubr.f32.gmra.mxu0 %v934
        %v1156 = vpop.f32.mrf.mxu0
        %v1157 = vadd.f32 %v1013, %v1156
        %v1158 = vpop.f32.mrf.mxu0
        %1159 = vmatprep.mubr.f32.mxu0 0.0
        %1160 = vmatmul.mubr.f32.gmra.mxu0 %v935
        %v1161 = vpop.f32.mrf.mxu0
        %v1162 = vadd.f32 %v1013, %v1161
        %v1163 = vpop.f32.mrf.mxu0
        %1164 = vmatprep.mubr.f32.mxu0 0.0
        %1165 = vmatmul.mubr.f32.gmra.mxu0 %v936
        %v1166 = vpop.f32.mrf.mxu0
        %v1167 = vadd.f32 %v1013, %v1166
        %v1168 = vpop.f32.mrf.mxu0
        %1169 = vmatprep.mubr.f32.mxu0 0.0
        %1170 = vmatmul.mubr.f32.gmra.mxu0 %v937
        %v1171 = vpop.f32.mrf.mxu0
        %v1172 = vadd.f32 %v1013, %v1171
        %v1173 = vpop.f32.mrf.mxu0
        %1174 = vmatprep.mubr.f32.mxu0 0.0
        %1175 = vmatmul.mubr.f32.gmra.mxu0 %v938
        %v1176 = vpop.f32.mrf.mxu0
        %v1177 = vadd.f32 %v1013, %v1176
        %v1178 = vpop.f32.mrf.mxu0
        %1179 = vmatprep.mubr.f32.mxu0 0.0
        %1180 = vmatmul.mubr.f32.gmra.mxu0 %v939
        %v1181 = vpop.f32.mrf.mxu0
        %v1182 = vadd.f32 %v1013, %v1181
        %v1183 = vpop.f32.mrf.mxu0
        %1184 = vmatprep.mubr.f32.mxu0 0.0
        %1185 = vmatmul.mubr.f32.gmra.mxu0 %v940
        %v1186 = vpop.f32.mrf.mxu0
        %v1187 = vadd.f32 %v1013, %v1186
        %v1188 = vpop.f32.mrf.mxu0
        %1189 = vmatprep.mubr.f32.mxu0 0.0
        %1190 = vmatmul.mubr.f32.gmra.mxu0 %v941
        %v1191 = vpop.f32.mrf.mxu0
        %v1192 = vadd.f32 %v1013, %v1191
        %v1193 = vpop.f32.mrf.mxu0
        %1194 = vmatprep.mubr.f32.mxu0 0.0
        %1195 = vmatmul.mubr.f32.gmra.mxu0 %v942
        %v1196 = vpop.f32.mrf.mxu0
        %v1197 = vadd.f32 %v1013, %v1196
        %v1198 = vpop.f32.mrf.mxu0
        %1199 = vmatprep.mubr.f32.mxu0 0.0
        %1200 = vmatmul.mubr.f32.gmra.mxu0 %v943
        %v1201 = vpop.f32.mrf.mxu0
        %v1202 = vadd.f32 %v1013, %v1201
        %v1203 = vpop.f32.mrf.mxu0
        %1204 = vmatprep.mubr.f32.mxu0 0.0
        %1205 = vmatmul.mubr.f32.gmra.mxu0 %v944
        %v1206 = vpop.f32.mrf.mxu0
        %v1207 = vadd.f32 %v1013, %v1206
        %v1208 = vpop.f32.mrf.mxu0
        %1209 = vmatprep.mubr.f32.mxu0 0.0
        %1210 = vmatmul.mubr.f32.gmra.mxu0 %v945
        %v1211 = vpop.f32.mrf.mxu0
        %v1212 = vadd.f32 %v1013, %v1211
        %v1213 = vpop.f32.mrf.mxu0
        %1214 = vmatprep.mubr.f32.mxu0 0.0
        %1215 = vmatmul.mubr.f32.gmra.mxu0 %v946
        %v1216 = vpop.f32.mrf.mxu0
        %v1217 = vadd.f32 %v1013, %v1216
        %v1218 = vpop.f32.mrf.mxu0
        %1219 = vmatprep.mubr.f32.mxu0 0.0
        %1220 = vmatmul.mubr.f32.gmra.mxu0 %v947
        %v1221 = vpop.f32.mrf.mxu0
        %v1222 = vadd.f32 %v1013, %v1221
        %v1223 = vpop.f32.mrf.mxu0
        %1224 = vmatprep.mubr.f32.mxu0 0.0
        %1225 = vmatmul.mubr.f32.gmra.mxu0 %v948
        %v1226 = vpop.f32.mrf.mxu0
        %v1227 = vadd.f32 %v1013, %v1226
        %v1228 = vpop.f32.mrf.mxu0
        %1229 = vmatprep.mubr.f32.mxu0 0.0
        %1230 = vmatmul.mubr.f32.gmra.mxu0 %v949
        %v1231 = vpop.f32.mrf.mxu0
        %v1232 = vadd.f32 %v1013, %v1231
        %v1233 = vpop.f32.mrf.mxu0
        %1234 = vmatprep.mubr.f32.mxu0 0.0
        %1235 = vmatmul.mubr.f32.gmra.mxu0 %v950
        %v1236 = vpop.f32.mrf.mxu0
        %v1237 = vadd.f32 %v1013, %v1236
        %v1238 = vpop.f32.mrf.mxu0
        %1239 = vdwg.mxu0
        %v1240 = vmax.f32 %v1082, 0.0
        %v1241 = vmax.f32 %v1087, 0.0
        %v1242 = vmax.f32 %v1092, 0.0
        %v1243 = vmax.f32 %v1097, 0.0
        %v1244 = vmax.f32 %v1102, 0.0
        %v1245 = vmax.f32 %v1107, 0.0
        %v1246 = vmax.f32 %v1112, 0.0
        %v1247 = vmax.f32 %v1117, 0.0
        %v1248 = vmax.f32 %v1122, 0.0
        %v1249 = vmax.f32 %v1127, 0.0
        %v1250 = vmax.f32 %v1132, 0.0
        %v1251 = vmax.f32 %v1137, 0.0
        %v1252 = vmax.f32 %v1142, 0.0
        %v1253 = vmax.f32 %v1147, 0.0
        %v1254 = vmax.f32 %v1152, 0.0
        %v1255 = vmax.f32 %v1157, 0.0
        %v1256 = vmax.f32 %v1162, 0.0
        %v1257 = vmax.f32 %v1167, 0.0
        %v1258 = vmax.f32 %v1172, 0.0
        %v1259 = vmax.f32 %v1177, 0.0
        %v1260 = vmax.f32 %v1182, 0.0
        %v1261 = vmax.f32 %v1187, 0.0
        %v1262 = vmax.f32 %v1192, 0.0
        %v1263 = vmax.f32 %v1197, 0.0
        %v1264 = vmax.f32 %v1202, 0.0
        %v1265 = vmax.f32 %v1207, 0.0
        %v1266 = vmax.f32 %v1212, 0.0
        %v1267 = vmax.f32 %v1217, 0.0
        %v1268 = vmax.f32 %v1222, 0.0
        %v1269 = vmax.f32 %v1227, 0.0
        %v1270 = vmax.f32 %v1232, 0.0
        %v1271 = vmax.f32 %v1237, 0.0
        %v1272 = vld [vmem:[#allocation3] sm:$0x1]
        %v1273 = vadd.f32 %v1240, %v1241
        %v1274 = vadd.f32 %v1273, %v1242
        %v1275 = vadd.f32 %v1274, %v1243
        %v1276 = vadd.f32 %v1275, %v1244
        %v1277 = vadd.f32 %v1276, %v1245
        %v1278 = vadd.f32 %v1277, %v1246
        %v1279 = vadd.f32 %v1278, %v1247
        %v1280 = vadd.f32 %v1279, %v1248
        %v1281 = vadd.f32 %v1280, %v1249
        %v1282 = vadd.f32 %v1281, %v1250
        %v1283 = vadd.f32 %v1282, %v1251
        %v1284 = vadd.f32 %v1283, %v1252
        %v1285 = vadd.f32 %v1284, %v1253
        %v1286 = vadd.f32 %v1285, %v1254
        %v1287 = vadd.f32 %v1286, %v1255
        %v1288 = vadd.f32 %v1287, %v1256
        %v1289 = vadd.f32 %v1288, %v1257
        %v1290 = vadd.f32 %v1289, %v1258
        %v1291 = vadd.f32 %v1290, %v1259
        %v1292 = vadd.f32 %v1291, %v1260
        %v1293 = vadd.f32 %v1292, %v1261
        %v1294 = vadd.f32 %v1293, %v1262
        %v1295 = vadd.f32 %v1294, %v1263
        %v1296 = vadd.f32 %v1295, %v1264
        %v1297 = vadd.f32 %v1296, %v1265
        %v1298 = vadd.f32 %v1297, %v1266
        %v1299 = vadd.f32 %v1298, %v1267
        %v1300 = vadd.f32 %v1299, %v1268
        %v1301 = vadd.f32 %v1300, %v1269
        %v1302 = vadd.f32 %v1301, %v1270
        %v1303 = vadd.f32 %v1302, %v1271
        %v1304 = vrot.slane %v1303, 4
        %v1305 = vadd.f32 %v1303, %v1304
        %v1306 = vrot.slane %v1305, 2
        %v1307 = vadd.f32 %v1305, %v1306
        %v1308 = vrot.slane %v1307, 1
        %v1309 = vadd.f32 %v1307, %v1308
        %v1310 = vmul.f32 %v1309, 0.00390625
        %v1311 = vadd.f32 %v1272, %v1310
        %1312 = vst [vmem:[#allocation3] sm:$0x1] %v1311
        %v1313 = vld [vmem:[#allocation11] sm:$0xff]
        %v1314 = vld [vmem:[#allocation11 + $0x8] sm:$0xff]
        %v1315 = vld [vmem:[#allocation11 + $0x10] sm:$0xff]
        %v1316 = vld [vmem:[#allocation11 + $0x18] sm:$0xff]
        %v1317 = vld [vmem:[#allocation11 + $0x20] sm:$0xff]
        %v1318 = vld [vmem:[#allocation11 + $0x28] sm:$0xff]
        %v1319 = vld [vmem:[#allocation11 + $0x30] sm:$0xff]
        %v1320 = vld [vmem:[#allocation11 + $0x38] sm:$0xff]
        %v1321 = vld [vmem:[#allocation11 + $0x40] sm:$0xff]
        %v1322 = vld [vmem:[#allocation11 + $0x48] sm:$0xff]
        %v1323 = vld [vmem:[#allocation11 + $0x50] sm:$0xff]
        %v1324 = vld [vmem:[#allocation11 + $0x58] sm:$0xff]
        %v1325 = vld [vmem:[#allocation11 + $0x60] sm:$0xff]
        %v1326 = vld [vmem:[#allocation11 + $0x68] sm:$0xff]
        %v1327 = vld [vmem:[#allocation11 + $0x70] sm:$0xff]
        %v1328 = vld [vmem:[#allocation11 + $0x78] sm:$0xff]
        %v1329 = vld [vmem:[%s6] sm:$0x1]
        %v1331 = vlaneseq
        %v1332 = vshrl.u32 %v1331, 7
        %v1333 = vsub.s32 0, %v1332
        %v1334 = vrot.slane %v1329, %v1333
        %1336 = vmatprep.subr.mxu0 0.0
        %1337 = vmatpush1.msra.mxu0 %v1328
        %1338 = vmatprep.subr.mxu0 0.0
        %1339 = vmatpush1.msra.mxu0 %v1327
        %1340 = vmatprep.subr.mxu0 0.0
        %1341 = vmatpush1.msra.mxu0 %v1326
        %1342 = vmatprep.subr.mxu0 0.0
        %1343 = vmatpush1.msra.mxu0 %v1325
        %1344 = vmatprep.subr.mxu0 0.0
        %1345 = vmatpush1.msra.mxu0 %v1324
        %1346 = vmatprep.subr.mxu0 0.0
        %1347 = vmatpush1.msra.mxu0 %v1323
        %1348 = vmatprep.subr.mxu0 0.0
        %1349 = vmatpush1.msra.mxu0 %v1322
        %1350 = vmatprep.subr.mxu0 0.0
        %1351 = vmatpush1.msra.mxu0 %v1321
        %1352 = vmatprep.subr.mxu0 0.0
        %1353 = vmatpush1.msra.mxu0 %v1320
        %1354 = vmatprep.subr.mxu0 0.0
        %1355 = vmatpush1.msra.mxu0 %v1319
        %1356 = vmatprep.subr.mxu0 0.0
        %1357 = vmatpush1.msra.mxu0 %v1318
        %1358 = vmatprep.subr.mxu0 0.0
        %1359 = vmatpush1.msra.mxu0 %v1317
        %1360 = vmatprep.subr.mxu0 0.0
        %1361 = vmatpush1.msra.mxu0 %v1316
        %1362 = vmatprep.subr.mxu0 0.0
        %1363 = vmatpush1.msra.mxu0 %v1315
        %1364 = vmatprep.subr.mxu0 0.0
        %1365 = vmatpush1.msra.mxu0 %v1314
        %1366 = vmatprep.subr.mxu0 0.0
        %1367 = vmatpush1.msra.mxu0 %v1313
        %1368 = vmatprep.subr.mxu0 0.0
        %1369 = vmatpush2.msra.mxu0 0.0
        %1370 = vmatprep.subr.mxu0 0.0
        %1371 = vmatpush2.msra.mxu0 0.0
        %1372 = vmatprep.subr.mxu0 0.0
        %1373 = vmatpush2.msra.mxu0 0.0
        %1374 = vmatprep.subr.mxu0 0.0
        %1375 = vmatpush2.msra.mxu0 0.0
        %1376 = vmatprep.subr.mxu0 0.0
        %1377 = vmatpush2.msra.mxu0 0.0
        %1378 = vmatprep.subr.mxu0 0.0
        %1379 = vmatpush2.msra.mxu0 0.0
        %1380 = vmatprep.subr.mxu0 0.0
        %1381 = vmatpush2.msra.mxu0 0.0
        %1382 = vmatprep.subr.mxu0 0.0
        %1383 = vmatpush2.msra.mxu0 0.0
        %1384 = vmatprep.subr.mxu0 0.0
        %1385 = vmatpush2.msra.mxu0 0.0
        %1386 = vmatprep.subr.mxu0 0.0
        %1387 = vmatpush2.msra.mxu0 0.0
        %1388 = vmatprep.subr.mxu0 0.0
        %1389 = vmatpush2.msra.mxu0 0.0
        %1390 = vmatprep.subr.mxu0 0.0
        %1391 = vmatpush2.msra.mxu0 0.0
        %1392 = vmatprep.subr.mxu0 0.0
        %1393 = vmatpush2.msra.mxu0 0.0
        %1394 = vmatprep.subr.mxu0 0.0
        %1395 = vmatpush2.msra.mxu0 0.0
        %1396 = vmatprep.subr.mxu0 0.0
        %1397 = vmatpush2.msra.mxu0 0.0
        %1398 = vmatprep.subr.mxu0 0.0
        %1399 = vmatpush2.msra.mxu0 0.0
        %1400 = vmatprep.mubr.f32.mxu0 0.0
        %1401 = vmatmul.mubr.f32.gmra.mxu0 %v1240
        %v1402 = vpop.f32.mrf.mxu0
        %v1403 = vadd.f32 %v1334, %v1402
        %v1404 = vpop.f32.mrf.mxu0
        %1405 = vmatprep.mubr.f32.mxu0 0.0
        %1406 = vmatmul.mubr.f32.gmra.mxu0 %v1241
        %v1407 = vpop.f32.mrf.mxu0
        %v1408 = vadd.f32 %v1334, %v1407
        %v1409 = vpop.f32.mrf.mxu0
        %1410 = vmatprep.mubr.f32.mxu0 0.0
        %1411 = vmatmul.mubr.f32.gmra.mxu0 %v1242
        %v1412 = vpop.f32.mrf.mxu0
        %v1413 = vadd.f32 %v1334, %v1412
        %v1414 = vpop.f32.mrf.mxu0
        %1415 = vmatprep.mubr.f32.mxu0 0.0
        %1416 = vmatmul.mubr.f32.gmra.mxu0 %v1243
        %v1417 = vpop.f32.mrf.mxu0
        %v1418 = vadd.f32 %v1334, %v1417
        %v1419 = vpop.f32.mrf.mxu0
        %1420 = vmatprep.mubr.f32.mxu0 0.0
        %1421 = vmatmul.mubr.f32.gmra.mxu0 %v1244
        %v1422 = vpop.f32.mrf.mxu0
        %v1423 = vadd.f32 %v1334, %v1422
        %v1424 = vpop.f32.mrf.mxu0
        %1425 = vmatprep.mubr.f32.mxu0 0.0
        %1426 = vmatmul.mubr.f32.gmra.mxu0 %v1245
        %v1427 = vpop.f32.mrf.mxu0
        %v1428 = vadd.f32 %v1334, %v1427
        %v1429 = vpop.f32.mrf.mxu0
        %1430 = vmatprep.mubr.f32.mxu0 0.0
        %1431 = vmatmul.mubr.f32.gmra.mxu0 %v1246
        %v1432 = vpop.f32.mrf.mxu0
        %v1433 = vadd.f32 %v1334, %v1432
        %v1434 = vpop.f32.mrf.mxu0
        %1435 = vmatprep.mubr.f32.mxu0 0.0
        %1436 = vmatmul.mubr.f32.gmra.mxu0 %v1247
        %v1437 = vpop.f32.mrf.mxu0
        %v1438 = vadd.f32 %v1334, %v1437
        %v1439 = vpop.f32.mrf.mxu0
        %1440 = vmatprep.mubr.f32.mxu0 0.0
        %1441 = vmatmul.mubr.f32.gmra.mxu0 %v1248
        %v1442 = vpop.f32.mrf.mxu0
        %v1443 = vadd.f32 %v1334, %v1442
        %v1444 = vpop.f32.mrf.mxu0
        %1445 = vmatprep.mubr.f32.mxu0 0.0
        %1446 = vmatmul.mubr.f32.gmra.mxu0 %v1249
        %v1447 = vpop.f32.mrf.mxu0
        %v1448 = vadd.f32 %v1334, %v1447
        %v1449 = vpop.f32.mrf.mxu0
        %1450 = vmatprep.mubr.f32.mxu0 0.0
        %1451 = vmatmul.mubr.f32.gmra.mxu0 %v1250
        %v1452 = vpop.f32.mrf.mxu0
        %v1453 = vadd.f32 %v1334, %v1452
        %v1454 = vpop.f32.mrf.mxu0
        %1455 = vmatprep.mubr.f32.mxu0 0.0
        %1456 = vmatmul.mubr.f32.gmra.mxu0 %v1251
        %v1457 = vpop.f32.mrf.mxu0
        %v1458 = vadd.f32 %v1334, %v1457
        %v1459 = vpop.f32.mrf.mxu0
        %1460 = vmatprep.mubr.f32.mxu0 0.0
        %1461 = vmatmul.mubr.f32.gmra.mxu0 %v1252
        %v1462 = vpop.f32.mrf.mxu0
        %v1463 = vadd.f32 %v1334, %v1462
        %v1464 = vpop.f32.mrf.mxu0
        %1465 = vmatprep.mubr.f32.mxu0 0.0
        %1466 = vmatmul.mubr.f32.gmra.mxu0 %v1253
        %v1467 = vpop.f32.mrf.mxu0
        %v1468 = vadd.f32 %v1334, %v1467
        %v1469 = vpop.f32.mrf.mxu0
        %1470 = vmatprep.mubr.f32.mxu0 0.0
        %1471 = vmatmul.mubr.f32.gmra.mxu0 %v1254
        %v1472 = vpop.f32.mrf.mxu0
        %v1473 = vadd.f32 %v1334, %v1472
        %v1474 = vpop.f32.mrf.mxu0
        %1475 = vmatprep.mubr.f32.mxu0 0.0
        %1476 = vmatmul.mubr.f32.gmra.mxu0 %v1255
        %v1477 = vpop.f32.mrf.mxu0
        %v1478 = vadd.f32 %v1334, %v1477
        %v1479 = vpop.f32.mrf.mxu0
        %1480 = vmatprep.mubr.f32.mxu0 0.0
        %1481 = vmatmul.mubr.f32.gmra.mxu0 %v1256
        %v1482 = vpop.f32.mrf.mxu0
        %v1483 = vadd.f32 %v1334, %v1482
        %v1484 = vpop.f32.mrf.mxu0
        %1485 = vmatprep.mubr.f32.mxu0 0.0
        %1486 = vmatmul.mubr.f32.gmra.mxu0 %v1257
        %v1487 = vpop.f32.mrf.mxu0
        %v1488 = vadd.f32 %v1334, %v1487
        %v1489 = vpop.f32.mrf.mxu0
        %1490 = vmatprep.mubr.f32.mxu0 0.0
        %1491 = vmatmul.mubr.f32.gmra.mxu0 %v1258
        %v1492 = vpop.f32.mrf.mxu0
        %v1493 = vadd.f32 %v1334, %v1492
        %v1494 = vpop.f32.mrf.mxu0
        %1495 = vmatprep.mubr.f32.mxu0 0.0
        %1496 = vmatmul.mubr.f32.gmra.mxu0 %v1259
        %v1497 = vpop.f32.mrf.mxu0
        %v1498 = vadd.f32 %v1334, %v1497
        %v1499 = vpop.f32.mrf.mxu0
        %1500 = vmatprep.mubr.f32.mxu0 0.0
        %1501 = vmatmul.mubr.f32.gmra.mxu0 %v1260
        %v1502 = vpop.f32.mrf.mxu0
        %v1503 = vadd.f32 %v1334, %v1502
        %v1504 = vpop.f32.mrf.mxu0
        %1505 = vmatprep.mubr.f32.mxu0 0.0
        %1506 = vmatmul.mubr.f32.gmra.mxu0 %v1261
        %v1507 = vpop.f32.mrf.mxu0
        %v1508 = vadd.f32 %v1334, %v1507
        %v1509 = vpop.f32.mrf.mxu0
        %1510 = vmatprep.mubr.f32.mxu0 0.0
        %1511 = vmatmul.mubr.f32.gmra.mxu0 %v1262
        %v1512 = vpop.f32.mrf.mxu0
        %v1513 = vadd.f32 %v1334, %v1512
        %v1514 = vpop.f32.mrf.mxu0
        %1515 = vmatprep.mubr.f32.mxu0 0.0
        %1516 = vmatmul.mubr.f32.gmra.mxu0 %v1263
        %v1517 = vpop.f32.mrf.mxu0
        %v1518 = vadd.f32 %v1334, %v1517
        %v1519 = vpop.f32.mrf.mxu0
        %1520 = vmatprep.mubr.f32.mxu0 0.0
        %1521 = vmatmul.mubr.f32.gmra.mxu0 %v1264
        %v1522 = vpop.f32.mrf.mxu0
        %v1523 = vadd.f32 %v1334, %v1522
        %v1524 = vpop.f32.mrf.mxu0
        %1525 = vmatprep.mubr.f32.mxu0 0.0
        %1526 = vmatmul.mubr.f32.gmra.mxu0 %v1265
        %v1527 = vpop.f32.mrf.mxu0
        %v1528 = vadd.f32 %v1334, %v1527
        %v1529 = vpop.f32.mrf.mxu0
        %1530 = vmatprep.mubr.f32.mxu0 0.0
        %1531 = vmatmul.mubr.f32.gmra.mxu0 %v1266
        %v1532 = vpop.f32.mrf.mxu0
        %v1533 = vadd.f32 %v1334, %v1532
        %v1534 = vpop.f32.mrf.mxu0
        %1535 = vmatprep.mubr.f32.mxu0 0.0
        %1536 = vmatmul.mubr.f32.gmra.mxu0 %v1267
        %v1537 = vpop.f32.mrf.mxu0
        %v1538 = vadd.f32 %v1334, %v1537
        %v1539 = vpop.f32.mrf.mxu0
        %1540 = vmatprep.mubr.f32.mxu0 0.0
        %1541 = vmatmul.mubr.f32.gmra.mxu0 %v1268
        %v1542 = vpop.f32.mrf.mxu0
        %v1543 = vadd.f32 %v1334, %v1542
        %v1544 = vpop.f32.mrf.mxu0
        %1545 = vmatprep.mubr.f32.mxu0 0.0
        %1546 = vmatmul.mubr.f32.gmra.mxu0 %v1269
        %v1547 = vpop.f32.mrf.mxu0
        %v1548 = vadd.f32 %v1334, %v1547
        %v1549 = vpop.f32.mrf.mxu0
        %1550 = vmatprep.mubr.f32.mxu0 0.0
        %1551 = vmatmul.mubr.f32.gmra.mxu0 %v1270
        %v1552 = vpop.f32.mrf.mxu0
        %v1553 = vadd.f32 %v1334, %v1552
        %v1554 = vpop.f32.mrf.mxu0
        %1555 = vmatprep.mubr.f32.mxu0 0.0
        %1556 = vmatmul.mubr.f32.gmra.mxu0 %v1271
        %v1557 = vpop.f32.mrf.mxu0
        %v1558 = vadd.f32 %v1334, %v1557
        %v1559 = vpop.f32.mrf.mxu0
        %1560 = vdwg.mxu0
        %v1561 = vmax.f32 %v1403, 0.0
        %v1562 = vmax.f32 %v1408, 0.0
        %v1563 = vmax.f32 %v1413, 0.0
        %v1564 = vmax.f32 %v1418, 0.0
        %v1565 = vmax.f32 %v1423, 0.0
        %v1566 = vmax.f32 %v1428, 0.0
        %v1567 = vmax.f32 %v1433, 0.0
        %v1568 = vmax.f32 %v1438, 0.0
        %v1569 = vmax.f32 %v1443, 0.0
        %v1570 = vmax.f32 %v1448, 0.0
        %v1571 = vmax.f32 %v1453, 0.0
        %v1572 = vmax.f32 %v1458, 0.0
        %v1573 = vmax.f32 %v1463, 0.0
        %v1574 = vmax.f32 %v1468, 0.0
        %v1575 = vmax.f32 %v1473, 0.0
        %v1576 = vmax.f32 %v1478, 0.0
        %v1577 = vmax.f32 %v1483, 0.0
        %v1578 = vmax.f32 %v1488, 0.0
        %v1579 = vmax.f32 %v1493, 0.0
        %v1580 = vmax.f32 %v1498, 0.0
        %v1581 = vmax.f32 %v1503, 0.0
        %v1582 = vmax.f32 %v1508, 0.0
        %v1583 = vmax.f32 %v1513, 0.0
        %v1584 = vmax.f32 %v1518, 0.0
        %v1585 = vmax.f32 %v1523, 0.0
        %v1586 = vmax.f32 %v1528, 0.0
        %v1587 = vmax.f32 %v1533, 0.0
        %v1588 = vmax.f32 %v1538, 0.0
        %v1589 = vmax.f32 %v1543, 0.0
        %v1590 = vmax.f32 %v1548, 0.0
        %v1591 = vmax.f32 %v1553, 0.0
        %v1592 = vmax.f32 %v1558, 0.0
        %v1593 = vld [vmem:[#allocation4] sm:$0x1]
        %v1594 = vadd.f32 %v1561, %v1562
        %v1595 = vadd.f32 %v1594, %v1563
        %v1596 = vadd.f32 %v1595, %v1564
        %v1597 = vadd.f32 %v1596, %v1565
        %v1598 = vadd.f32 %v1597, %v1566
        %v1599 = vadd.f32 %v1598, %v1567
        %v1600 = vadd.f32 %v1599, %v1568
        %v1601 = vadd.f32 %v1600, %v1569
        %v1602 = vadd.f32 %v1601, %v1570
        %v1603 = vadd.f32 %v1602, %v1571
        %v1604 = vadd.f32 %v1603, %v1572
        %v1605 = vadd.f32 %v1604, %v1573
        %v1606 = vadd.f32 %v1605, %v1574
        %v1607 = vadd.f32 %v1606, %v1575
        %v1608 = vadd.f32 %v1607, %v1576
        %v1609 = vadd.f32 %v1608, %v1577
        %v1610 = vadd.f32 %v1609, %v1578
        %v1611 = vadd.f32 %v1610, %v1579
        %v1612 = vadd.f32 %v1611, %v1580
        %v1613 = vadd.f32 %v1612, %v1581
        %v1614 = vadd.f32 %v1613, %v1582
        %v1615 = vadd.f32 %v1614, %v1583
        %v1616 = vadd.f32 %v1615, %v1584
        %v1617 = vadd.f32 %v1616, %v1585
        %v1618 = vadd.f32 %v1617, %v1586
        %v1619 = vadd.f32 %v1618, %v1587
        %v1620 = vadd.f32 %v1619, %v1588
        %v1621 = vadd.f32 %v1620, %v1589
        %v1622 = vadd.f32 %v1621, %v1590
        %v1623 = vadd.f32 %v1622, %v1591
        %v1624 = vadd.f32 %v1623, %v1592
        %v1625 = vrot.slane %v1624, 4
        %v1626 = vadd.f32 %v1624, %v1625
        %v1627 = vrot.slane %v1626, 2
        %v1628 = vadd.f32 %v1626, %v1627
        %v1629 = vrot.slane %v1628, 1
        %v1630 = vadd.f32 %v1628, %v1629
        %v1631 = vmul.f32 %v1630, 0.00390625
        %v1632 = vadd.f32 %v1593, %v1631
        %1633 = vst [vmem:[#allocation4] sm:$0x1] %v1632
        // Predicated region
        $region105: #{tpu_custom_call.1} parent=71 // pred_check
          %p1634 = pneg %p632
        $region106: #{tpu_custom_call.1} parent=71 // pred_check_branch
          %1636 = sbr.rel (%p1634) target = $region108
        $region107: #{tpu_custom_call.1} parent=71 // pred_region
          %v1637 = vld [vmem:[#allocation2] sm:$0x1]
          %v1638 = vld [vmem:[#allocation13] sm:$0xff]
          %v1639 = vld [vmem:[#allocation13 + $0x8] sm:$0xff]
          %v1640 = vld [vmem:[#allocation13 + $0x10] sm:$0xff]
          %v1641 = vld [vmem:[#allocation13 + $0x18] sm:$0xff]
          %v1642 = vld [vmem:[#allocation13 + $0x20] sm:$0xff]
          %v1643 = vld [vmem:[#allocation13 + $0x28] sm:$0xff]
          %v1644 = vld [vmem:[#allocation13 + $0x30] sm:$0xff]
          %v1645 = vld [vmem:[#allocation13 + $0x38] sm:$0xff]
          %v1646 = vld [vmem:[#allocation13 + $0x40] sm:$0xff]
          %v1647 = vld [vmem:[#allocation13 + $0x48] sm:$0xff]
          %v1648 = vld [vmem:[#allocation13 + $0x50] sm:$0xff]
          %v1649 = vld [vmem:[#allocation13 + $0x58] sm:$0xff]
          %v1650 = vld [vmem:[#allocation13 + $0x60] sm:$0xff]
          %v1651 = vld [vmem:[#allocation13 + $0x68] sm:$0xff]
          %v1652 = vld [vmem:[#allocation13 + $0x70] sm:$0xff]
          %v1653 = vld [vmem:[#allocation13 + $0x78] sm:$0xff]
          %v1654 = vld [vmem:[#allocation13 + $0x80] sm:$0xff]
          %v1655 = vld [vmem:[#allocation13 + $0x88] sm:$0xff]
          %v1656 = vld [vmem:[#allocation13 + $0x90] sm:$0xff]
          %v1657 = vld [vmem:[#allocation13 + $0x98] sm:$0xff]
          %v1658 = vld [vmem:[#allocation13 + $0xa0] sm:$0xff]
          %v1659 = vld [vmem:[#allocation13 + $0xa8] sm:$0xff]
          %v1660 = vld [vmem:[#allocation13 + $0xb0] sm:$0xff]
          %v1661 = vld [vmem:[#allocation13 + $0xb8] sm:$0xff]
          %v1662 = vld [vmem:[#allocation13 + $0xc0] sm:$0xff]
          %v1663 = vld [vmem:[#allocation13 + $0xc8] sm:$0xff]
          %v1664 = vld [vmem:[#allocation13 + $0xd0] sm:$0xff]
          %v1665 = vld [vmem:[#allocation13 + $0xd8] sm:$0xff]
          %v1666 = vld [vmem:[#allocation13 + $0xe0] sm:$0xff]
          %v1667 = vld [vmem:[#allocation13 + $0xe8] sm:$0xff]
          %v1668 = vld [vmem:[#allocation13 + $0xf0] sm:$0xff]
          %v1669 = vld [vmem:[#allocation13 + $0xf8] sm:$0xff]
          %v1670 = vld [vmem:[#allocation13 + $0x100] sm:$0xff]
          %v1671 = vld [vmem:[#allocation13 + $0x108] sm:$0xff]
          %v1672 = vld [vmem:[#allocation13 + $0x110] sm:$0xff]
          %v1673 = vld [vmem:[#allocation13 + $0x118] sm:$0xff]
          %v1674 = vld [vmem:[#allocation13 + $0x120] sm:$0xff]
          %v1675 = vld [vmem:[#allocation13 + $0x128] sm:$0xff]
          %v1676 = vld [vmem:[#allocation13 + $0x130] sm:$0xff]
          %v1677 = vld [vmem:[#allocation13 + $0x138] sm:$0xff]
          %v1678 = vld [vmem:[#allocation13 + $0x140] sm:$0xff]
          %v1679 = vld [vmem:[#allocation13 + $0x148] sm:$0xff]
          %v1680 = vld [vmem:[#allocation13 + $0x150] sm:$0xff]
          %v1681 = vld [vmem:[#allocation13 + $0x158] sm:$0xff]
          %v1682 = vld [vmem:[#allocation13 + $0x160] sm:$0xff]
          %v1683 = vld [vmem:[#allocation13 + $0x168] sm:$0xff]
          %v1684 = vld [vmem:[#allocation13 + $0x170] sm:$0xff]
          %v1685 = vld [vmem:[#allocation13 + $0x178] sm:$0xff]
          %1686 = vmatprep.subr.mxu0 %v1684
          %1687 = vmatpush1.msra.mxu0 %v1683
          %1688 = vmatprep.subr.mxu0 %v1681
          %1689 = vmatpush1.msra.mxu0 %v1680
          %1690 = vmatprep.subr.mxu0 %v1678
          %1691 = vmatpush1.msra.mxu0 %v1677
          %1692 = vmatprep.subr.mxu0 %v1675
          %1693 = vmatpush1.msra.mxu0 %v1674
          %1694 = vmatprep.subr.mxu0 %v1672
          %1695 = vmatpush1.msra.mxu0 %v1671
          %1696 = vmatprep.subr.mxu0 %v1669
          %1697 = vmatpush1.msra.mxu0 %v1668
          %1698 = vmatprep.subr.mxu0 %v1666
          %1699 = vmatpush1.msra.mxu0 %v1665
          %1700 = vmatprep.subr.mxu0 %v1663
          %1701 = vmatpush1.msra.mxu0 %v1662
          %1702 = vmatprep.subr.mxu0 %v1660
          %1703 = vmatpush1.msra.mxu0 %v1659
          %1704 = vmatprep.subr.mxu0 %v1657
          %1705 = vmatpush1.msra.mxu0 %v1656
          %1706 = vmatprep.subr.mxu0 %v1654
          %1707 = vmatpush1.msra.mxu0 %v1653
          %1708 = vmatprep.subr.mxu0 %v1651
          %1709 = vmatpush1.msra.mxu0 %v1650
          %1710 = vmatprep.subr.mxu0 %v1648
          %1711 = vmatpush1.msra.mxu0 %v1647
          %1712 = vmatprep.subr.mxu0 %v1645
          %1713 = vmatpush1.msra.mxu0 %v1644
          %1714 = vmatprep.subr.mxu0 %v1642
          %1715 = vmatpush1.msra.mxu0 %v1641
          %1716 = vmatprep.subr.mxu0 %v1639
          %1717 = vmatpush1.msra.mxu0 %v1638
          %1718 = vmatprep.subr.mxu0 0.0
          %1719 = vmatpush2.msra.mxu0 0.0
          %1720 = vmatprep.subr.mxu0 0.0
          %1721 = vmatpush2.msra.mxu0 0.0
          %1722 = vmatprep.subr.mxu0 0.0
          %1723 = vmatpush2.msra.mxu0 0.0
          %1724 = vmatprep.subr.mxu0 0.0
          %1725 = vmatpush2.msra.mxu0 0.0
          %1726 = vmatprep.subr.mxu0 0.0
          %1727 = vmatpush2.msra.mxu0 0.0
          %1728 = vmatprep.subr.mxu0 0.0
          %1729 = vmatpush2.msra.mxu0 0.0
          %1730 = vmatprep.subr.mxu0 0.0
          %1731 = vmatpush2.msra.mxu0 0.0
          %1732 = vmatprep.subr.mxu0 0.0
          %1733 = vmatpush2.msra.mxu0 0.0
          %1734 = vmatprep.subr.mxu0 0.0
          %1735 = vmatpush2.msra.mxu0 0.0
          %1736 = vmatprep.subr.mxu0 0.0
          %1737 = vmatpush2.msra.mxu0 0.0
          %1738 = vmatprep.subr.mxu0 0.0
          %1739 = vmatpush2.msra.mxu0 0.0
          %1740 = vmatprep.subr.mxu0 0.0
          %1741 = vmatpush2.msra.mxu0 0.0
          %1742 = vmatprep.subr.mxu0 0.0
          %1743 = vmatpush2.msra.mxu0 0.0
          %1744 = vmatprep.subr.mxu0 0.0
          %1745 = vmatpush2.msra.mxu0 0.0
          %1746 = vmatprep.subr.mxu0 0.0
          %1747 = vmatpush2.msra.mxu0 0.0
          %1748 = vmatprep.subr.mxu0 0.0
          %1749 = vmatpush2.msra.mxu0 0.0
          %1750 = vmatprep.mubr.f32.mxu0 0.0
          %1751 = vmatmul.mubr.f32.gmra.mxu0 %v1637
          %v1752 = vpop.f32.mrf.mxu0
          %v1753 = vadd.f32 0.0, %v1752
          %v1754 = vpop.f32.mrf.mxu0
          %v1755 = vadd.f32 0.0, %v1754
          %1756 = vdwg.mxu0
          %1757 = vmatprep.subr.mxu0 0.0
          %1758 = vmatpush1.msra.mxu0 %v1685
          %1759 = vmatprep.subr.mxu0 0.0
          %1760 = vmatpush1.msra.mxu0 %v1682
          %1761 = vmatprep.subr.mxu0 0.0
          %1762 = vmatpush1.msra.mxu0 %v1679
          %1763 = vmatprep.subr.mxu0 0.0
          %1764 = vmatpush1.msra.mxu0 %v1676
          %1765 = vmatprep.subr.mxu0 0.0
          %1766 = vmatpush1.msra.mxu0 %v1673
          %1767 = vmatprep.subr.mxu0 0.0
          %1768 = vmatpush1.msra.mxu0 %v1670
          %1769 = vmatprep.subr.mxu0 0.0
          %1770 = vmatpush1.msra.mxu0 %v1667
          %1771 = vmatprep.subr.mxu0 0.0
          %1772 = vmatpush1.msra.mxu0 %v1664
          %1773 = vmatprep.subr.mxu0 0.0
          %1774 = vmatpush1.msra.mxu0 %v1661
          %1775 = vmatprep.subr.mxu0 0.0
          %1776 = vmatpush1.msra.mxu0 %v1658
          %1777 = vmatprep.subr.mxu0 0.0
          %1778 = vmatpush1.msra.mxu0 %v1655
          %1779 = vmatprep.subr.mxu0 0.0
          %1780 = vmatpush1.msra.mxu0 %v1652
          %1781 = vmatprep.subr.mxu0 0.0
          %1782 = vmatpush1.msra.mxu0 %v1649
          %1783 = vmatprep.subr.mxu0 0.0
          %1784 = vmatpush1.msra.mxu0 %v1646
          %1785 = vmatprep.subr.mxu0 0.0
          %1786 = vmatpush1.msra.mxu0 %v1643
          %1787 = vmatprep.subr.mxu0 0.0
          %1788 = vmatpush1.msra.mxu0 %v1640
          %1789 = vmatprep.subr.mxu0 0.0
          %1790 = vmatpush2.msra.mxu0 0.0
          %1791 = vmatprep.subr.mxu0 0.0
          %1792 = vmatpush2.msra.mxu0 0.0
          %1793 = vmatprep.subr.mxu0 0.0
          %1794 = vmatpush2.msra.mxu0 0.0
          %1795 = vmatprep.subr.mxu0 0.0
          %1796 = vmatpush2.msra.mxu0 0.0
          %1797 = vmatprep.subr.mxu0 0.0
          %1798 = vmatpush2.msra.mxu0 0.0
          %1799 = vmatprep.subr.mxu0 0.0
          %1800 = vmatpush2.msra.mxu0 0.0
          %1801 = vmatprep.subr.mxu0 0.0
          %1802 = vmatpush2.msra.mxu0 0.0
          %1803 = vmatprep.subr.mxu0 0.0
          %1804 = vmatpush2.msra.mxu0 0.0
          %1805 = vmatprep.subr.mxu0 0.0
          %1806 = vmatpush2.msra.mxu0 0.0
          %1807 = vmatprep.subr.mxu0 0.0
          %1808 = vmatpush2.msra.mxu0 0.0
          %1809 = vmatprep.subr.mxu0 0.0
          %1810 = vmatpush2.msra.mxu0 0.0
          %1811 = vmatprep.subr.mxu0 0.0
          %1812 = vmatpush2.msra.mxu0 0.0
          %1813 = vmatprep.subr.mxu0 0.0
          %1814 = vmatpush2.msra.mxu0 0.0
          %1815 = vmatprep.subr.mxu0 0.0
          %1816 = vmatpush2.msra.mxu0 0.0
          %1817 = vmatprep.subr.mxu0 0.0
          %1818 = vmatpush2.msra.mxu0 0.0
          %1819 = vmatprep.subr.mxu0 0.0
          %1820 = vmatpush2.msra.mxu0 0.0
          %1821 = vmatprep.mubr.f32.mxu0 0.0
          %1822 = vmatmul.mubr.f32.gmra.mxu0 %v1637
          %v1823 = vpop.f32.mrf.mxu0
          %v1824 = vadd.f32 0.0, %v1823
          %v1825 = vpop.f32.mrf.mxu0
          %1826 = vdwg.mxu0
          %v1827 = vcombine.low %v1753, %v1755
          %v1829 = vunpack.c.l.s4 1934713408
          %v1830 = vunpack.c.0.s8 %v1829
          %v1831 = vlaneseq
          %v1832 = vshrl.u32 %v1831, 7
          %v1833 = vsub.s32 %v1830, %v1832
          %v1834 = vrot.slane %v1827, %v1833
          %v1836 = vlaneseq
          %v1837 = vshrl.u32 %v1836, 7
          %v1838 = vsub.s32 0, %v1837
          %v1839 = vrot.slane %v1637, %v1838
          %v1841 = vmul.f32 %v1834, %v1839
          %vm1842 = vcmask 1041408
          %v1843 = vsel %vm1842, %v1841, 0.0
          %1844 = vadd.xlane.f32.xlu0 %v1843
          %v1845 = vpop.xlane.xlu0 %1844
          %v1847 = vlaneseq
          %v1848 = vand.u32 %v1847, 127
          %v1849 = vlaneseq
          %v1850 = vshrl.u32 %v1849, 7
          %v1851 = vsub.s32 %v1848, %v1850
          %v1852 = vrot.slane %v1845, %v1851
          %v1854 = vsub.f32 %v1824, %v1852
          %v1855 = vld [vmem:[%s8] sm:$0x1]
          %v1856 = vsub.f32 %v1854, %v1855
          %vm1857 = vcmask 8192
          %1858 = vst.msk [vmem:[%s618] sm:$0x1] %vm1857, %v1856
          %v1859 = vld [vmem:[#allocation3] sm:$0x1]
          %v1860 = vld [vmem:[#allocation14] sm:$0xff]
          %v1861 = vld [vmem:[#allocation14 + $0x8] sm:$0xff]
          %v1862 = vld [vmem:[#allocation14 + $0x10] sm:$0xff]
          %v1863 = vld [vmem:[#allocation14 + $0x18] sm:$0xff]
          %v1864 = vld [vmem:[#allocation14 + $0x20] sm:$0xff]
          %v1865 = vld [vmem:[#allocation14 + $0x28] sm:$0xff]
          %v1866 = vld [vmem:[#allocation14 + $0x30] sm:$0xff]
          %v1867 = vld [vmem:[#allocation14 + $0x38] sm:$0xff]
          %v1868 = vld [vmem:[#allocation14 + $0x40] sm:$0xff]
          %v1869 = vld [vmem:[#allocation14 + $0x48] sm:$0xff]
          %v1870 = vld [vmem:[#allocation14 + $0x50] sm:$0xff]
          %v1871 = vld [vmem:[#allocation14 + $0x58] sm:$0xff]
          %v1872 = vld [vmem:[#allocation14 + $0x60] sm:$0xff]
          %v1873 = vld [vmem:[#allocation14 + $0x68] sm:$0xff]
          %v1874 = vld [vmem:[#allocation14 + $0x70] sm:$0xff]
          %v1875 = vld [vmem:[#allocation14 + $0x78] sm:$0xff]
          %v1876 = vld [vmem:[#allocation14 + $0x80] sm:$0xff]
          %v1877 = vld [vmem:[#allocation14 + $0x88] sm:$0xff]
          %v1878 = vld [vmem:[#allocation14 + $0x90] sm:$0xff]
          %v1879 = vld [vmem:[#allocation14 + $0x98] sm:$0xff]
          %v1880 = vld [vmem:[#allocation14 + $0xa0] sm:$0xff]
          %v1881 = vld [vmem:[#allocation14 + $0xa8] sm:$0xff]
          %v1882 = vld [vmem:[#allocation14 + $0xb0] sm:$0xff]
          %v1883 = vld [vmem:[#allocation14 + $0xb8] sm:$0xff]
          %v1884 = vld [vmem:[#allocation14 + $0xc0] sm:$0xff]
          %v1885 = vld [vmem:[#allocation14 + $0xc8] sm:$0xff]
          %v1886 = vld [vmem:[#allocation14 + $0xd0] sm:$0xff]
          %v1887 = vld [vmem:[#allocation14 + $0xd8] sm:$0xff]
          %v1888 = vld [vmem:[#allocation14 + $0xe0] sm:$0xff]
          %v1889 = vld [vmem:[#allocation14 + $0xe8] sm:$0xff]
          %v1890 = vld [vmem:[#allocation14 + $0xf0] sm:$0xff]
          %v1891 = vld [vmem:[#allocation14 + $0xf8] sm:$0xff]
          %v1892 = vld [vmem:[#allocation14 + $0x100] sm:$0xff]
          %v1893 = vld [vmem:[#allocation14 + $0x108] sm:$0xff]
          %v1894 = vld [vmem:[#allocation14 + $0x110] sm:$0xff]
          %v1895 = vld [vmem:[#allocation14 + $0x118] sm:$0xff]
          %v1896 = vld [vmem:[#allocation14 + $0x120] sm:$0xff]
          %v1897 = vld [vmem:[#allocation14 + $0x128] sm:$0xff]
          %v1898 = vld [vmem:[#allocation14 + $0x130] sm:$0xff]
          %v1899 = vld [vmem:[#allocation14 + $0x138] sm:$0xff]
          %v1900 = vld [vmem:[#allocation14 + $0x140] sm:$0xff]
          %v1901 = vld [vmem:[#allocation14 + $0x148] sm:$0xff]
          %v1902 = vld [vmem:[#allocation14 + $0x150] sm:$0xff]
          %v1903 = vld [vmem:[#allocation14 + $0x158] sm:$0xff]
          %v1904 = vld [vmem:[#allocation14 + $0x160] sm:$0xff]
          %v1905 = vld [vmem:[#allocation14 + $0x168] sm:$0xff]
          %v1906 = vld [vmem:[#allocation14 + $0x170] sm:$0xff]
          %v1907 = vld [vmem:[#allocation14 + $0x178] sm:$0xff]
          %1908 = vmatprep.subr.mxu0 %v1906
          %1909 = vmatpush1.msra.mxu0 %v1905
          %1910 = vmatprep.subr.mxu0 %v1903
          %1911 = vmatpush1.msra.mxu0 %v1902
          %1912 = vmatprep.subr.mxu0 %v1900
          %1913 = vmatpush1.msra.mxu0 %v1899
          %1914 = vmatprep.subr.mxu0 %v1897
          %1915 = vmatpush1.msra.mxu0 %v1896
          %1916 = vmatprep.subr.mxu0 %v1894
          %1917 = vmatpush1.msra.mxu0 %v1893
          %1918 = vmatprep.subr.mxu0 %v1891
          %1919 = vmatpush1.msra.mxu0 %v1890
          %1920 = vmatprep.subr.mxu0 %v1888
          %1921 = vmatpush1.msra.mxu0 %v1887
          %1922 = vmatprep.subr.mxu0 %v1885
          %1923 = vmatpush1.msra.mxu0 %v1884
          %1924 = vmatprep.subr.mxu0 %v1882
          %1925 = vmatpush1.msra.mxu0 %v1881
          %1926 = vmatprep.subr.mxu0 %v1879
          %1927 = vmatpush1.msra.mxu0 %v1878
          %1928 = vmatprep.subr.mxu0 %v1876
          %1929 = vmatpush1.msra.mxu0 %v1875
          %1930 = vmatprep.subr.mxu0 %v1873
          %1931 = vmatpush1.msra.mxu0 %v1872
          %1932 = vmatprep.subr.mxu0 %v1870
          %1933 = vmatpush1.msra.mxu0 %v1869
          %1934 = vmatprep.subr.mxu0 %v1867
          %1935 = vmatpush1.msra.mxu0 %v1866
          %1936 = vmatprep.subr.mxu0 %v1864
          %1937 = vmatpush1.msra.mxu0 %v1863
          %1938 = vmatprep.subr.mxu0 %v1861
          %1939 = vmatpush1.msra.mxu0 %v1860
          %1940 = vmatprep.subr.mxu0 0.0
          %1941 = vmatpush2.msra.mxu0 0.0
          %1942 = vmatprep.subr.mxu0 0.0
          %1943 = vmatpush2.msra.mxu0 0.0
          %1944 = vmatprep.subr.mxu0 0.0
          %1945 = vmatpush2.msra.mxu0 0.0
          %1946 = vmatprep.subr.mxu0 0.0
          %1947 = vmatpush2.msra.mxu0 0.0
          %1948 = vmatprep.subr.mxu0 0.0
          %1949 = vmatpush2.msra.mxu0 0.0
          %1950 = vmatprep.subr.mxu0 0.0
          %1951 = vmatpush2.msra.mxu0 0.0
          %1952 = vmatprep.subr.mxu0 0.0
          %1953 = vmatpush2.msra.mxu0 0.0
          %1954 = vmatprep.subr.mxu0 0.0
          %1955 = vmatpush2.msra.mxu0 0.0
          %1956 = vmatprep.subr.mxu0 0.0
          %1957 = vmatpush2.msra.mxu0 0.0
          %1958 = vmatprep.subr.mxu0 0.0
          %1959 = vmatpush2.msra.mxu0 0.0
          %1960 = vmatprep.subr.mxu0 0.0
          %1961 = vmatpush2.msra.mxu0 0.0
          %1962 = vmatprep.subr.mxu0 0.0
          %1963 = vmatpush2.msra.mxu0 0.0
          %1964 = vmatprep.subr.mxu0 0.0
          %1965 = vmatpush2.msra.mxu0 0.0
          %1966 = vmatprep.subr.mxu0 0.0
          %1967 = vmatpush2.msra.mxu0 0.0
          %1968 = vmatprep.subr.mxu0 0.0
          %1969 = vmatpush2.msra.mxu0 0.0
          %1970 = vmatprep.subr.mxu0 0.0
          %1971 = vmatpush2.msra.mxu0 0.0
          %1972 = vmatprep.mubr.f32.mxu0 0.0
          %1973 = vmatmul.mubr.f32.gmra.mxu0 %v1859
          %v1974 = vpop.f32.mrf.mxu0
          %v1975 = vadd.f32 0.0, %v1974
          %v1976 = vpop.f32.mrf.mxu0
          %v1977 = vadd.f32 0.0, %v1976
          %1978 = vdwg.mxu0
          %1979 = vmatprep.subr.mxu0 0.0
          %1980 = vmatpush1.msra.mxu0 %v1907
          %1981 = vmatprep.subr.mxu0 0.0
          %1982 = vmatpush1.msra.mxu0 %v1904
          %1983 = vmatprep.subr.mxu0 0.0
          %1984 = vmatpush1.msra.mxu0 %v1901
          %1985 = vmatprep.subr.mxu0 0.0
          %1986 = vmatpush1.msra.mxu0 %v1898
          %1987 = vmatprep.subr.mxu0 0.0
          %1988 = vmatpush1.msra.mxu0 %v1895
          %1989 = vmatprep.subr.mxu0 0.0
          %1990 = vmatpush1.msra.mxu0 %v1892
          %1991 = vmatprep.subr.mxu0 0.0
          %1992 = vmatpush1.msra.mxu0 %v1889
          %1993 = vmatprep.subr.mxu0 0.0
          %1994 = vmatpush1.msra.mxu0 %v1886
          %1995 = vmatprep.subr.mxu0 0.0
          %1996 = vmatpush1.msra.mxu0 %v1883
          %1997 = vmatprep.subr.mxu0 0.0
          %1998 = vmatpush1.msra.mxu0 %v1880
          %1999 = vmatprep.subr.mxu0 0.0
          %2000 = vmatpush1.msra.mxu0 %v1877
          %2001 = vmatprep.subr.mxu0 0.0
          %2002 = vmatpush1.msra.mxu0 %v1874
          %2003 = vmatprep.subr.mxu0 0.0
          %2004 = vmatpush1.msra.mxu0 %v1871
          %2005 = vmatprep.subr.mxu0 0.0
          %2006 = vmatpush1.msra.mxu0 %v1868
          %2007 = vmatprep.subr.mxu0 0.0
          %2008 = vmatpush1.msra.mxu0 %v1865
          %2009 = vmatprep.subr.mxu0 0.0
          %2010 = vmatpush1.msra.mxu0 %v1862
          %2011 = vmatprep.subr.mxu0 0.0
          %2012 = vmatpush2.msra.mxu0 0.0
          %2013 = vmatprep.subr.mxu0 0.0
          %2014 = vmatpush2.msra.mxu0 0.0
          %2015 = vmatprep.subr.mxu0 0.0
          %2016 = vmatpush2.msra.mxu0 0.0
          %2017 = vmatprep.subr.mxu0 0.0
          %2018 = vmatpush2.msra.mxu0 0.0
          %2019 = vmatprep.subr.mxu0 0.0
          %2020 = vmatpush2.msra.mxu0 0.0
          %2021 = vmatprep.subr.mxu0 0.0
          %2022 = vmatpush2.msra.mxu0 0.0
          %2023 = vmatprep.subr.mxu0 0.0
          %2024 = vmatpush2.msra.mxu0 0.0
          %2025 = vmatprep.subr.mxu0 0.0
          %2026 = vmatpush2.msra.mxu0 0.0
          %2027 = vmatprep.subr.mxu0 0.0
          %2028 = vmatpush2.msra.mxu0 0.0
          %2029 = vmatprep.subr.mxu0 0.0
          %2030 = vmatpush2.msra.mxu0 0.0
          %2031 = vmatprep.subr.mxu0 0.0
          %2032 = vmatpush2.msra.mxu0 0.0
          %2033 = vmatprep.subr.mxu0 0.0
          %2034 = vmatpush2.msra.mxu0 0.0
          %2035 = vmatprep.subr.mxu0 0.0
          %2036 = vmatpush2.msra.mxu0 0.0
          %2037 = vmatprep.subr.mxu0 0.0
          %2038 = vmatpush2.msra.mxu0 0.0
          %2039 = vmatprep.subr.mxu0 0.0
          %2040 = vmatpush2.msra.mxu0 0.0
          %2041 = vmatprep.subr.mxu0 0.0
          %2042 = vmatpush2.msra.mxu0 0.0
          %2043 = vmatprep.mubr.f32.mxu0 0.0
          %2044 = vmatmul.mubr.f32.gmra.mxu0 %v1859
          %v2045 = vpop.f32.mrf.mxu0
          %v2046 = vadd.f32 0.0, %v2045
          %v2047 = vpop.f32.mrf.mxu0
          %2048 = vdwg.mxu0
          %v2049 = vcombine.low %v1975, %v1977
          %v2051 = vunpack.c.l.s4 1934713408
          %v2052 = vunpack.c.0.s8 %v2051
          %v2053 = vlaneseq
          %v2054 = vshrl.u32 %v2053, 7
          %v2055 = vsub.s32 %v2052, %v2054
          %v2056 = vrot.slane %v2049, %v2055
          %v2058 = vlaneseq
          %v2059 = vshrl.u32 %v2058, 7
          %v2060 = vsub.s32 0, %v2059
          %v2061 = vrot.slane %v1859, %v2060
          %v2063 = vmul.f32 %v2056, %v2061
          %v2064 = vsel %vm1842, %v2063, 0.0
          %2065 = vadd.xlane.f32.xlu0 %v2064
          %v2066 = vpop.xlane.xlu0 %2065
          %v2068 = vlaneseq
          %v2069 = vshrl.u32 %v2068, 7
          %v2070 = vsub.s32 %v1848, %v2069
          %v2071 = vrot.slane %v2066, %v2070
          %v2073 = vsub.f32 %v2046, %v2071
          %v2074 = vld [vmem:[%s10] sm:$0x1]
          %v2075 = vsub.f32 %v2073, %v2074
          %2076 = vst.msk [vmem:[%s624] sm:$0x1] %vm1857, %v2075
          %v2077 = vld [vmem:[#allocation4] sm:$0x1]
          %v2078 = vld [vmem:[#allocation16] sm:$0xff]
          %v2079 = vld [vmem:[#allocation16 + $0x8] sm:$0xff]
          %v2080 = vld [vmem:[#allocation16 + $0x10] sm:$0xff]
          %v2081 = vld [vmem:[#allocation16 + $0x18] sm:$0xff]
          %v2082 = vld [vmem:[#allocation16 + $0x20] sm:$0xff]
          %v2083 = vld [vmem:[#allocation16 + $0x28] sm:$0xff]
          %v2084 = vld [vmem:[#allocation16 + $0x30] sm:$0xff]
          %v2085 = vld [vmem:[#allocation16 + $0x38] sm:$0xff]
          %v2086 = vld [vmem:[#allocation16 + $0x40] sm:$0xff]
          %v2087 = vld [vmem:[#allocation16 + $0x48] sm:$0xff]
          %v2088 = vld [vmem:[#allocation16 + $0x50] sm:$0xff]
          %v2089 = vld [vmem:[#allocation16 + $0x58] sm:$0xff]
          %v2090 = vld [vmem:[#allocation16 + $0x60] sm:$0xff]
          %v2091 = vld [vmem:[#allocation16 + $0x68] sm:$0xff]
          %v2092 = vld [vmem:[#allocation16 + $0x70] sm:$0xff]
          %v2093 = vld [vmem:[#allocation16 + $0x78] sm:$0xff]
          %v2094 = vld [vmem:[#allocation16 + $0x80] sm:$0xff]
          %v2095 = vld [vmem:[#allocation16 + $0x88] sm:$0xff]
          %v2096 = vld [vmem:[#allocation16 + $0x90] sm:$0xff]
          %v2097 = vld [vmem:[#allocation16 + $0x98] sm:$0xff]
          %v2098 = vld [vmem:[#allocation16 + $0xa0] sm:$0xff]
          %v2099 = vld [vmem:[#allocation16 + $0xa8] sm:$0xff]
          %v2100 = vld [vmem:[#allocation16 + $0xb0] sm:$0xff]
          %v2101 = vld [vmem:[#allocation16 + $0xb8] sm:$0xff]
          %v2102 = vld [vmem:[#allocation16 + $0xc0] sm:$0xff]
          %v2103 = vld [vmem:[#allocation16 + $0xc8] sm:$0xff]
          %v2104 = vld [vmem:[#allocation16 + $0xd0] sm:$0xff]
          %v2105 = vld [vmem:[#allocation16 + $0xd8] sm:$0xff]
          %v2106 = vld [vmem:[#allocation16 + $0xe0] sm:$0xff]
          %v2107 = vld [vmem:[#allocation16 + $0xe8] sm:$0xff]
          %v2108 = vld [vmem:[#allocation16 + $0xf0] sm:$0xff]
          %v2109 = vld [vmem:[#allocation16 + $0xf8] sm:$0xff]
          %v2110 = vld [vmem:[#allocation16 + $0x100] sm:$0xff]
          %v2111 = vld [vmem:[#allocation16 + $0x108] sm:$0xff]
          %v2112 = vld [vmem:[#allocation16 + $0x110] sm:$0xff]
          %v2113 = vld [vmem:[#allocation16 + $0x118] sm:$0xff]
          %v2114 = vld [vmem:[#allocation16 + $0x120] sm:$0xff]
          %v2115 = vld [vmem:[#allocation16 + $0x128] sm:$0xff]
          %v2116 = vld [vmem:[#allocation16 + $0x130] sm:$0xff]
          %v2117 = vld [vmem:[#allocation16 + $0x138] sm:$0xff]
          %v2118 = vld [vmem:[#allocation16 + $0x140] sm:$0xff]
          %v2119 = vld [vmem:[#allocation16 + $0x148] sm:$0xff]
          %v2120 = vld [vmem:[#allocation16 + $0x150] sm:$0xff]
          %v2121 = vld [vmem:[#allocation16 + $0x158] sm:$0xff]
          %v2122 = vld [vmem:[#allocation16 + $0x160] sm:$0xff]
          %v2123 = vld [vmem:[#allocation16 + $0x168] sm:$0xff]
          %v2124 = vld [vmem:[#allocation16 + $0x170] sm:$0xff]
          %v2125 = vld [vmem:[#allocation16 + $0x178] sm:$0xff]
          %2126 = vmatprep.subr.mxu0 %v2124
          %2127 = vmatpush1.msra.mxu0 %v2123
          %2128 = vmatprep.subr.mxu0 %v2121
          %2129 = vmatpush1.msra.mxu0 %v2120
          %2130 = vmatprep.subr.mxu0 %v2118
          %2131 = vmatpush1.msra.mxu0 %v2117
          %2132 = vmatprep.subr.mxu0 %v2115
          %2133 = vmatpush1.msra.mxu0 %v2114
          %2134 = vmatprep.subr.mxu0 %v2112
          %2135 = vmatpush1.msra.mxu0 %v2111
          %2136 = vmatprep.subr.mxu0 %v2109
          %2137 = vmatpush1.msra.mxu0 %v2108
          %2138 = vmatprep.subr.mxu0 %v2106
          %2139 = vmatpush1.msra.mxu0 %v2105
          %2140 = vmatprep.subr.mxu0 %v2103
          %2141 = vmatpush1.msra.mxu0 %v2102
          %2142 = vmatprep.subr.mxu0 %v2100
          %2143 = vmatpush1.msra.mxu0 %v2099
          %2144 = vmatprep.subr.mxu0 %v2097
          %2145 = vmatpush1.msra.mxu0 %v2096
          %2146 = vmatprep.subr.mxu0 %v2094
          %2147 = vmatpush1.msra.mxu0 %v2093
          %2148 = vmatprep.subr.mxu0 %v2091
          %2149 = vmatpush1.msra.mxu0 %v2090
          %2150 = vmatprep.subr.mxu0 %v2088
          %2151 = vmatpush1.msra.mxu0 %v2087
          %2152 = vmatprep.subr.mxu0 %v2085
          %2153 = vmatpush1.msra.mxu0 %v2084
          %2154 = vmatprep.subr.mxu0 %v2082
          %2155 = vmatpush1.msra.mxu0 %v2081
          %2156 = vmatprep.subr.mxu0 %v2079
          %2157 = vmatpush1.msra.mxu0 %v2078
          %2158 = vmatprep.subr.mxu0 0.0
          %2159 = vmatpush2.msra.mxu0 0.0
          %2160 = vmatprep.subr.mxu0 0.0
          %2161 = vmatpush2.msra.mxu0 0.0
          %2162 = vmatprep.subr.mxu0 0.0
          %2163 = vmatpush2.msra.mxu0 0.0
          %2164 = vmatprep.subr.mxu0 0.0
          %2165 = vmatpush2.msra.mxu0 0.0
          %2166 = vmatprep.subr.mxu0 0.0
          %2167 = vmatpush2.msra.mxu0 0.0
          %2168 = vmatprep.subr.mxu0 0.0
          %2169 = vmatpush2.msra.mxu0 0.0
          %2170 = vmatprep.subr.mxu0 0.0
          %2171 = vmatpush2.msra.mxu0 0.0
          %2172 = vmatprep.subr.mxu0 0.0
          %2173 = vmatpush2.msra.mxu0 0.0
          %2174 = vmatprep.subr.mxu0 0.0
          %2175 = vmatpush2.msra.mxu0 0.0
          %2176 = vmatprep.subr.mxu0 0.0
          %2177 = vmatpush2.msra.mxu0 0.0
          %2178 = vmatprep.subr.mxu0 0.0
          %2179 = vmatpush2.msra.mxu0 0.0
          %2180 = vmatprep.subr.mxu0 0.0
          %2181 = vmatpush2.msra.mxu0 0.0
          %2182 = vmatprep.subr.mxu0 0.0
          %2183 = vmatpush2.msra.mxu0 0.0
          %2184 = vmatprep.subr.mxu0 0.0
          %2185 = vmatpush2.msra.mxu0 0.0
          %2186 = vmatprep.subr.mxu0 0.0
          %2187 = vmatpush2.msra.mxu0 0.0
          %2188 = vmatprep.subr.mxu0 0.0
          %2189 = vmatpush2.msra.mxu0 0.0
          %2190 = vmatprep.mubr.f32.mxu0 0.0
          %2191 = vmatmul.mubr.f32.gmra.mxu0 %v2077
          %v2192 = vpop.f32.mrf.mxu0
          %v2193 = vadd.f32 0.0, %v2192
          %v2194 = vpop.f32.mrf.mxu0
          %v2195 = vadd.f32 0.0, %v2194
          %2196 = vdwg.mxu0
          %2197 = vmatprep.subr.mxu0 0.0
          %2198 = vmatpush1.msra.mxu0 %v2125
          %2199 = vmatprep.subr.mxu0 0.0
          %2200 = vmatpush1.msra.mxu0 %v2122
          %2201 = vmatprep.subr.mxu0 0.0
          %2202 = vmatpush1.msra.mxu0 %v2119
          %2203 = vmatprep.subr.mxu0 0.0
          %2204 = vmatpush1.msra.mxu0 %v2116
          %2205 = vmatprep.subr.mxu0 0.0
          %2206 = vmatpush1.msra.mxu0 %v2113
          %2207 = vmatprep.subr.mxu0 0.0
          %2208 = vmatpush1.msra.mxu0 %v2110
          %2209 = vmatprep.subr.mxu0 0.0
          %2210 = vmatpush1.msra.mxu0 %v2107
          %2211 = vmatprep.subr.mxu0 0.0
          %2212 = vmatpush1.msra.mxu0 %v2104
          %2213 = vmatprep.subr.mxu0 0.0
          %2214 = vmatpush1.msra.mxu0 %v2101
          %2215 = vmatprep.subr.mxu0 0.0
          %2216 = vmatpush1.msra.mxu0 %v2098
          %2217 = vmatprep.subr.mxu0 0.0
          %2218 = vmatpush1.msra.mxu0 %v2095
          %2219 = vmatprep.subr.mxu0 0.0
          %2220 = vmatpush1.msra.mxu0 %v2092
          %2221 = vmatprep.subr.mxu0 0.0
          %2222 = vmatpush1.msra.mxu0 %v2089
          %2223 = vmatprep.subr.mxu0 0.0
          %2224 = vmatpush1.msra.mxu0 %v2086
          %2225 = vmatprep.subr.mxu0 0.0
          %2226 = vmatpush1.msra.mxu0 %v2083
          %2227 = vmatprep.subr.mxu0 0.0
          %2228 = vmatpush1.msra.mxu0 %v2080
          %2229 = vmatprep.subr.mxu0 0.0
          %2230 = vmatpush2.msra.mxu0 0.0
          %2231 = vmatprep.subr.mxu0 0.0
          %2232 = vmatpush2.msra.mxu0 0.0
          %2233 = vmatprep.subr.mxu0 0.0
          %2234 = vmatpush2.msra.mxu0 0.0
          %2235 = vmatprep.subr.mxu0 0.0
          %2236 = vmatpush2.msra.mxu0 0.0
          %2237 = vmatprep.subr.mxu0 0.0
          %2238 = vmatpush2.msra.mxu0 0.0
          %2239 = vmatprep.subr.mxu0 0.0
          %2240 = vmatpush2.msra.mxu0 0.0
          %2241 = vmatprep.subr.mxu0 0.0
          %2242 = vmatpush2.msra.mxu0 0.0
          %2243 = vmatprep.subr.mxu0 0.0
          %2244 = vmatpush2.msra.mxu0 0.0
          %2245 = vmatprep.subr.mxu0 0.0
          %2246 = vmatpush2.msra.mxu0 0.0
          %2247 = vmatprep.subr.mxu0 0.0
          %2248 = vmatpush2.msra.mxu0 0.0
          %2249 = vmatprep.subr.mxu0 0.0
          %2250 = vmatpush2.msra.mxu0 0.0
          %2251 = vmatprep.subr.mxu0 0.0
          %2252 = vmatpush2.msra.mxu0 0.0
          %2253 = vmatprep.subr.mxu0 0.0
          %2254 = vmatpush2.msra.mxu0 0.0
          %2255 = vmatprep.subr.mxu0 0.0
          %2256 = vmatpush2.msra.mxu0 0.0
          %2257 = vmatprep.subr.mxu0 0.0
          %2258 = vmatpush2.msra.mxu0 0.0
          %2259 = vmatprep.subr.mxu0 0.0
          %2260 = vmatpush2.msra.mxu0 0.0
          %2261 = vmatprep.mubr.f32.mxu0 0.0
          %2262 = vmatmul.mubr.f32.gmra.mxu0 %v2077
          %v2263 = vpop.f32.mrf.mxu0
          %v2264 = vadd.f32 0.0, %v2263
          %v2265 = vpop.f32.mrf.mxu0
          %2266 = vdwg.mxu0
          %v2267 = vcombine.low %v2193, %v2195
          %v2269 = vunpack.c.l.s4 1934713408
          %v2270 = vunpack.c.0.s8 %v2269
          %v2271 = vlaneseq
          %v2272 = vshrl.u32 %v2271, 7
          %v2273 = vsub.s32 %v2270, %v2272
          %v2274 = vrot.slane %v2267, %v2273
          %v2276 = vlaneseq
          %v2277 = vshrl.u32 %v2276, 7
          %v2278 = vsub.s32 0, %v2277
          %v2279 = vrot.slane %v2077, %v2278
          %v2281 = vmul.f32 %v2274, %v2279
          %v2282 = vsel %vm1842, %v2281, 0.0
          %2283 = vadd.xlane.f32.xlu0 %v2282
          %v2284 = vpop.xlane.xlu0 %2283
          %v2286 = vlaneseq
          %v2287 = vshrl.u32 %v2286, 7
          %v2288 = vsub.s32 %v1848, %v2287
          %v2289 = vrot.slane %v2284, %v2288
          %v2291 = vsub.f32 %v2264, %v2289
          %v2292 = vld [vmem:[%s12] sm:$0x1]
          %v2293 = vsub.f32 %v2291, %v2292
          %2294 = vst.msk [vmem:[%s630] sm:$0x1] %vm1857, %v2293
        $region108: #{tpu_custom_call.1} parent=71 // pred_fallthru
          _
        %s2295 = sand.u32 %s339, 1
        %s2296 = scalar_lea.sflag [#allocation7], %s2295
        %s2297 = sand.u32 %s339, 1
        %s2298 = scalar_lea.vmem [#allocation17], %s2297
        %s2299 = sand.u32 %s39, 1
        %s2300 = scalar_lea.sflag [#allocation19], %s2299
        %s2301 = sand.u32 %s365, 1
        %s2302 = scalar_lea.vmem [#allocation18], %s2301
        %s2303 = sand.u32 %s39, 1
        %s2304 = scalar_lea.sflag [#allocation19], %s2303
        %s2305 = sand.u32 %s391, 1
        %s2306 = scalar_lea.vmem [#allocation20], %s2305
        // Predicated region
        $region109: #{tpu_custom_call.1} parent=71 // pred_check
          %p2307 = pneg %p349
        $region110: #{tpu_custom_call.1} parent=71 // pred_check_branch
          %2309 = sbr.rel (%p2307) target = $region112
        $region111: #{tpu_custom_call.1} parent=71 // pred_region
          %s2311 = ssub.s32 16, 16
          %2312 = vsyncadd %s2296, %s2311
          %s2313 = smul.addr %s43, 16
          %s2314 = scalar_lea.hbm %s13, %s2313
          %s2316 = sshll.u32 %s2298, 4
          %s2317 = int_to_ptr.vmem [resolvable:$true] %s2316
          %2319 = dma.vmem_to_hbm [thread:$0]  %s2317, 16, %s2314, %s2296
        $region112: #{tpu_custom_call.1} parent=71 // pred_fallthru
          _
        // Predicated region
        $region113: #{tpu_custom_call.1} parent=71 // pred_check
          %p2320 = pneg %p375
        $region114: #{tpu_custom_call.1} parent=71 // pred_check_branch
          %2322 = sbr.rel (%p2320) target = $region116
        $region115: #{tpu_custom_call.1} parent=71 // pred_region
          %s2324 = ssub.s32 16, 16
          %2325 = vsyncadd %s2300, %s2324
          %s2326 = smul.addr %s43, 16
          %s2327 = scalar_lea.hbm %s14, %s2326
          %s2329 = sshll.u32 %s2302, 4
          %s2330 = int_to_ptr.vmem [resolvable:$true] %s2329
          %2332 = dma.vmem_to_hbm [thread:$0]  %s2330, 16, %s2327, %s2300
        $region116: #{tpu_custom_call.1} parent=71 // pred_fallthru
          _
        // Predicated region
        $region117: #{tpu_custom_call.1} parent=71 // pred_check
          %p2333 = pneg %p401
        $region118: #{tpu_custom_call.1} parent=71 // pred_check_branch
          %2335 = sbr.rel (%p2333) target = $region120
        $region119: #{tpu_custom_call.1} parent=71 // pred_region
          %s2337 = ssub.s32 16, 16
          %2338 = vsyncadd %s2304, %s2337
          %s2339 = smul.addr %s43, 16
          %s2340 = scalar_lea.hbm %s15, %s2339
          %s2342 = sshll.u32 %s2306, 4
          %s2343 = int_to_ptr.vmem [resolvable:$true] %s2342
          %2345 = dma.vmem_to_hbm [thread:$0]  %s2343, 16, %s2340, %s2304
        $region120: #{tpu_custom_call.1} parent=71 // pred_fallthru
          _
      $region72: #{tpu_custom_call.1} parent=5 // pred_fallthru
        _
      %p2346 = scmp.le.s32.totalorder 2, %s34
      // Predicated region
      $region121: #{tpu_custom_call.1} parent=5 // pred_check
        %p2347 = pneg %p2346
      $region122: #{tpu_custom_call.1} parent=5 // pred_check_branch
        %2349 = sbr.rel (%p2347) target = $region124
      $region123: #{tpu_custom_call.1} parent=5 // pred_region
        %s2350 = ssub.s32 %s34, 2
        // Predicated region
        $region125: #{tpu_custom_call.1} parent=123 // pred_check
          %p2351 = pneg %p355
        $region126: #{tpu_custom_call.1} parent=123 // pred_check_branch
          %2353 = sbr.rel (%p2351) target = $region128
        $region127: #{tpu_custom_call.1} parent=123 // pred_region
          %s2354 = sand.u32 %s340, 1
          %s2355 = scalar_lea.sflag [#allocation7], %s2354
          %s2356 = sand.u32 %s340, 1
          %s2357 = scalar_lea.vmem [#allocation17], %s2356
          %2358 = dma.done %s2355, 16
        $region128: #{tpu_custom_call.1} parent=123 // pred_fallthru
          _
        // Predicated region
        $region129: #{tpu_custom_call.1} parent=123 // pred_check
          %p2359 = pneg %p381
        $region130: #{tpu_custom_call.1} parent=123 // pred_check_branch
          %2361 = sbr.rel (%p2359) target = $region132
        $region131: #{tpu_custom_call.1} parent=123 // pred_region
          %s2362 = sand.u32 %s40, 1
          %s2363 = scalar_lea.sflag [#allocation19], %s2362
          %s2364 = sand.u32 %s366, 1
          %s2365 = scalar_lea.vmem [#allocation18], %s2364
          %2366 = dma.done %s2363, 16
        $region132: #{tpu_custom_call.1} parent=123 // pred_fallthru
          _
        // Predicated region
        $region133: #{tpu_custom_call.1} parent=123 // pred_check
          %p2367 = pneg %p407
        $region134: #{tpu_custom_call.1} parent=123 // pred_check_branch
          %2369 = sbr.rel (%p2367) target = $region136
        $region135: #{tpu_custom_call.1} parent=123 // pred_region
          %s2370 = sand.u32 %s40, 1
          %s2371 = scalar_lea.sflag [#allocation19], %s2370
          %s2372 = sand.u32 %s392, 1
          %s2373 = scalar_lea.vmem [#allocation20], %s2372
          %2374 = dma.done %s2371, 16
        $region136: #{tpu_custom_call.1} parent=123 // pred_fallthru
          _
      $region124: #{tpu_custom_call.1} parent=5 // pred_fallthru
        _
    $region6: #{tpu_custom_call.1} parent=1 // loop_footer
      %s38 = sadd.s32 1, %s34
    $region7: #{tpu_custom_call.1} parent=1 // loop_footer_branch
      %33 = sbr.rel target = $region3
    $region8: #{tpu_custom_call.1} parent=1 // loop_exit
      _
    %2375 = vsyncpa [#allocation6], 1
    %s2376 = scalar_lea.sflag [#allocation6], 1
    %2377 = vsyncpa %s2376, 1
    %2378 = vsyncpa [#allocation9], 1
    %2379 = vsyncpa [#allocation12], 1
    %2380 = vsyncpa [#allocation15], 1
    %2381 = vsyncpa [#allocation7], 1
    %s2382 = scalar_lea.sflag [#allocation7], 1
    %2383 = vsyncpa %s2382, 1
    %2384 = vsyncpa [#allocation19], 1
    %s2385 = scalar_lea.sflag [#allocation19], 1
    %2386 = vsyncpa %s2385, 1

</llo_original>
